<compile_context>
chip_gen: v7x
topology: tpu7x:2x2x1
jax: 0.10.0
libtpu: 0.0.40
codegen_flags: <defaults>
</compile_context>

<pallas_src>
import functools

import jax
import jax.numpy as jnp
from jax import lax
from jax.experimental import pallas as pl
from jax.experimental.pallas import tpu as pltpu


def _round_up(x, m):
    return ((x + m - 1) // m) * m


def _vmem_capacity_bytes():
    try:
        return int(pltpu.get_tpu_info().vmem_capacity_bytes)
    except Exception:
        return 64 << 20  # conservative default (v7x per-core VMEM)


_BIG = 1e9            # sentinel "index" value in the masked arg-reduce lanes
_PAD_SQ = 1e30        # padded-column squared norm -> never the hardest negative
_LABEL_PAD = int(jnp.iinfo(jnp.int32).min)  # assumes real labels != INT32_MIN


def _pick_tiles(n, dp, itemsize):
    """Generation/VMEM-aware tile choice.

    The column stream is re-read N/TM times, so TM (row tile) is grown as far
    as ~55% of this chip's VMEM allows (1024 on v5e/v6e for typical D, smaller
    on v7x's 64 MiB).  TN stays at 256: the four cross-lane arg-reductions per
    tile scale with TN and the XLU is the likely binding slot for small D.
    """
    cap = _vmem_capacity_bytes()
    budget = int(0.55 * cap)
    npad = _round_up(max(n, 1), 128)
    tn = min(256, npad)
    tm = 128
    for cand in (1024, 512, 256, 128):
        if cand > npad:
            continue
        need = (2 * cand * dp * itemsize      # row tile, double-buffered
                + 2 * dp * tn * itemsize      # transposed column tile, double-buffered
                + 8 * cand * tn * 4           # live f32 (TM, TN) temporaries
                + (2 << 20))
        if need <= budget:
            tm = cand
            break
    return min(tm, npad), tn, cap


# -----------------------------------------------------------------------------
# Fused pairwise-squared-distance + batch-hard mining kernel.
#   grid = (Np/TM, Np/TN); j (column tiles) is the reduction axis ("arbitrary").
#   Outputs per anchor: hardest-positive d2, hardest-negative d2, and their
#   column indices.  The (N, N) distance matrix never touches HBM.
# -----------------------------------------------------------------------------
def _mine_kernel(ei_ref, ejt_ref, sqi_ref, sqj_ref, li_ref, lj_ref,
                 best_pos_ref, best_neg_ref, pos_idx_ref, neg_idx_ref,
                 *, tm, tn):
    i = pl.program_id(0)
    j = pl.program_id(1)

    @pl.when(j == 0)
    def _():
        best_pos_ref[...] = jnp.full(best_pos_ref.shape, -jnp.inf, best_pos_ref.dtype)
        best_neg_ref[...] = jnp.full(best_neg_ref.shape, jnp.inf, best_neg_ref.dtype)
        pos_idx_ref[...] = jnp.zeros(pos_idx_ref.shape, pos_idx_ref.dtype)
        neg_idx_ref[...] = jnp.zeros(neg_idx_ref.shape, neg_idx_ref.dtype)

    # (TM, Dp) @ (Dp, TN): canonical MXU form (column tiles pre-transposed in
    # the wrapper, so no in-kernel transpose competes with the arg-reductions).
    gram = jnp.dot(ei_ref[...], ejt_ref[...], preferred_element_type=jnp.float32)
    d2 = jnp.maximum(sqi_ref[...] + sqj_ref[...] - 2.0 * gram, 0.0)   # (TM, TN)

    row_g = i * tm + lax.broadcasted_iota(jnp.int32, (tm, 1), 0)      # (TM, 1)
    col_g = j * tn + lax.broadcasted_iota(jnp.int32, (1, tn), 1)      # (1, TN)
    col_gf = col_g.astype(jnp.float32)

    same = li_ref[...] == lj_ref[...]   # padded labels (INT32_MIN) never match real ones

    # Hardest positive: max d2 over same-label columns, diagonal excluded.
    # The -inf sentinels already encode the mask; an all-masked tile never
    # passes the update guard, so no extra mask term is needed in the arg pass.
    pos_d = jnp.where(same & (row_g != col_g), d2, -jnp.inf)
    tile_pmax = jnp.max(pos_d, axis=1, keepdims=True)
    parg = jnp.min(jnp.where(pos_d == tile_pmax, col_gf, _BIG), axis=1, keepdims=True)
    upd_p = tile_pmax > best_pos_ref[...]
    pos_idx_ref[...] = jnp.where(upd_p, parg.astype(jnp.int32), pos_idx_ref[...])
    best_pos_ref[...] = jnp.where(upd_p, tile_pmax, best_pos_ref[...])

    # Hardest negative: min d2 over different-label columns.  Padded columns
    # carry a huge squared norm, so they can never win this min.
    neg_d = jnp.where(same, jnp.inf, d2)
    tile_nmin = jnp.min(neg_d, axis=1, keepdims=True)
    narg = jnp.min(jnp.where(neg_d == tile_nmin, col_gf, _BIG), axis=1, keepdims=True)
    upd_n = tile_nmin < best_neg_ref[...]
    neg_idx_ref[...] = jnp.where(upd_n, narg.astype(jnp.int32), neg_idx_ref[...])
    best_neg_ref[...] = jnp.where(upd_n, tile_nmin, best_neg_ref[...])


def _mine(embeddings, labels, *, matmul_dtype=None):
    """Returns per-anchor (hardest_pos_d2, hardest_neg_d2, pos_idx, neg_idx).

    matmul_dtype: optionally cast the gram matmul inputs (e.g. jnp.bfloat16 on
    v5e/v6e for a bf16-native MXU path); default keeps the input dtype so the
    exported distances feed the loss at full precision.
    """
    n, d = embeddings.shape
    e = embeddings if matmul_dtype is None else embeddings.astype(matmul_dtype)
    itemsize = jnp.dtype(e.dtype).itemsize
    dp = _round_up(d, 128)
    # TODO(synk): very large feature dims (Dp >= ~4K on v7x) would want a
    #             k-chunked gram accumulation; not needed for typical D.
    tm, tn, cap = _pick_tiles(n, dp, itemsize)
    np_ = _round_up(n, max(tm, tn))

    ep = jnp.pad(e, ((0, np_ - n), (0, dp - d)))
    ept = ep.T                                           # (Dp, Np) one-time transpose
    sq = jnp.sum(ep.astype(jnp.float32) ** 2, axis=-1)   # (Np,)
    sq = jnp.where(jnp.arange(np_) < n, sq, _PAD_SQ)
    lab = jnp.pad(labels.astype(jnp.int32), (0, np_ - n), constant_values=_LABEL_PAD)

    grid = (np_ // tm, np_ // tn)
    kernel = functools.partial(_mine_kernel, tm=tm, tn=tn)

    flops = 2 * np_ * np_ * dp
    bytes_acc = int(np_ * dp * itemsize                    # row stream (once)
                    + (np_ // tm) * np_ * dp * itemsize    # column stream per row tile
                    + 6 * np_ * 4)
    vmem_need = (2 * tm * dp * itemsize + 2 * dp * tn * itemsize
                 + 8 * tm * tn * 4 + (2 << 20))
    vmem_limit = int(min(max(vmem_need + (8 << 20), 16 << 20), int(0.70 * cap)))
    vmem_limit = int(max(vmem_limit, vmem_need + (2 << 20)))

    best_pos, best_neg, pos_idx, neg_idx = pl.pallas_call(
        kernel,
        out_shape=(
            jax.ShapeDtypeStruct((np_, 1), jnp.float32),
            jax.ShapeDtypeStruct((np_, 1), jnp.float32),
            jax.ShapeDtypeStruct((np_, 1), jnp.int32),
            jax.ShapeDtypeStruct((np_, 1), jnp.int32),
        ),
        grid_spec=pltpu.PrefetchScalarGridSpec(
            num_scalar_prefetch=0,
            grid=grid,
            in_specs=[
                pl.BlockSpec((tm, dp), lambda i, j: (i, 0)),   # row embeddings
                pl.BlockSpec((dp, tn), lambda i, j: (0, j)),   # column embeddings (pre-T)
                pl.BlockSpec((tm, 1), lambda i, j: (i, 0)),    # row sq norms
                pl.BlockSpec((1, tn), lambda i, j: (0, j)),    # col sq norms
                pl.BlockSpec((tm, 1), lambda i, j: (i, 0)),    # row labels
                pl.BlockSpec((1, tn), lambda i, j: (0, j)),    # col labels
            ],
            out_specs=(
                pl.BlockSpec((tm, 1), lambda i, j: (i, 0)),
                pl.BlockSpec((tm, 1), lambda i, j: (i, 0)),
                pl.BlockSpec((tm, 1), lambda i, j: (i, 0)),
                pl.BlockSpec((tm, 1), lambda i, j: (i, 0)),
            ),
        ),
        compiler_params=pltpu.CompilerParams(
            dimension_semantics=("parallel", "arbitrary"),
            vmem_limit_bytes=vmem_limit),
        cost_estimate=pl.CostEstimate(flops=flops, transcendentals=0,
                                      bytes_accessed=bytes_acc),
    )(ep, ept, sq[:, None], sq[None, :], lab[:, None], lab[None, :])

    return (best_pos[:n, 0], best_neg[:n, 0], pos_idx[:n, 0], neg_idx[:n, 0])


def batch_hard_sampler(embeddings, labels):
    """sampler(embeddings, labels) -> (anchor_idx, pos_idx, neg_idx)."""
    _, _, pos_idx, neg_idx = _mine(embeddings, labels)
    return jnp.arange(embeddings.shape[0]), pos_idx, neg_idx


# -----------------------------------------------------------------------------
# ContrastiveLoss.forward equivalent: Pallas mining + exact O(N) loss epilogue.
# -----------------------------------------------------------------------------
def contrastive_forward(embeddings, labels, *, margin=0.2, eps=1e-6,
                        matmul_dtype=None):
    n, d = embeddings.shape
    best_pos, best_neg, pos_idx, neg_idx = _mine(
        embeddings, labels, matmul_dtype=matmul_dtype)

    pos_valid = best_pos > -jnp.inf
    neg_valid = best_neg < jnp.inf

    # torch pairwise_distance(p=2, eps): ||x1 - x2 + eps||_2 — exact expansion.
    rowsum = jnp.sum(embeddings.astype(jnp.float32), axis=-1)           # (N,)
    eps_f = jnp.float32(eps)
    const = jnp.float32(d) * eps_f * eps_f
    pos_corr = 2.0 * eps_f * (rowsum - jnp.take(rowsum, pos_idx)) + const
    neg_corr = 2.0 * eps_f * (rowsum - jnp.take(rowsum, neg_idx)) + const

    pos_d2 = jnp.maximum(jnp.where(pos_valid, best_pos, 0.0) + pos_corr, 0.0)
    neg_d2 = jnp.maximum(jnp.where(neg_valid, best_neg, 0.0) + neg_corr, 0.0)

    pos_loss = pos_d2                                       # distance^2
    neg_loss = jnp.maximum(margin - jnp.sqrt(neg_d2), 0.0) ** 2

    pv = pos_valid.astype(jnp.float32)
    nv = neg_valid.astype(jnp.float32)
    total = jnp.sum(pos_loss * pv) + jnp.sum(neg_loss * nv)
    count = jnp.sum(pv) + jnp.sum(nv)
    return total / jnp.maximum(count, 1.0)    # mean(cat(pos_loss, neg_loss))


if __name__ == "__main__":
    key = jax.random.PRNGKey(0)
    N, D = 8, 32
    embeddings = jax.random.normal(key, (N, D), dtype=jnp.float32)
    labels = jnp.array([0, 0, 0, 0, 1, 1, 1, 1], dtype=jnp.int32)

    loss_small = contrastive_forward(embeddings, labels, margin=0.2)
    loss_big = contrastive_forward(embeddings, labels, margin=10.0)  # exercises hinge
    jax.block_until_ready((loss_small, loss_big))

    # Pure-JAX reference (same batch-hard miner + torch-style contrastive loss).
    d2_ref = jnp.sum((embeddings[:, None, :] - embeddings[None, :, :]) ** 2, -1)
    same = labels[:, None] == labels[None, :]
    eye = jnp.eye(N, dtype=bool)
    p_idx = jnp.argmax(jnp.where(same & ~eye, d2_ref, -jnp.inf), axis=1)
    n_idx = jnp.argmin(jnp.where(~same, d2_ref, jnp.inf), axis=1)
    a = embeddings
    pe = embeddings[p_idx]
    ne = embeddings[n_idx]
    d_ap = jnp.sqrt(jnp.sum((a - pe + 1e-6) ** 2, -1))
    d_an = jnp.sqrt(jnp.sum((a - ne + 1e-6) ** 2, -1))

    def ref_loss(margin):
        return jnp.mean(jnp.concatenate(
            [d_ap ** 2, jnp.maximum(margin - d_an, 0.0) ** 2]))

    assert loss_small.shape == () and bool(jnp.isfinite(loss_small))
    assert bool(jnp.allclose(loss_small, ref_loss(0.2), atol=1e-4, rtol=1e-4))
    assert bool(jnp.allclose(loss_big, ref_loss(10.0), atol=1e-4, rtol=1e-4))
    print("KERNEL_OK")
</pallas_src>

<mosaic_0001>
module attributes {stable_mosaic.version = 11 : i64} {
  func.func @_mine_kernel(%arg0: i32, %arg1: i32, %arg2: memref<128x128xf32, #tpu.memory_space<vmem>>, %arg3: memref<128x128xf32, #tpu.memory_space<vmem>>, %arg4: memref<128x1xf32, #tpu.memory_space<vmem>>, %arg5: memref<1x128xf32, #tpu.memory_space<vmem>>, %arg6: memref<128x1xi32, #tpu.memory_space<vmem>>, %arg7: memref<1x128xi32, #tpu.memory_space<vmem>>, %arg8: memref<128x1xf32, #tpu.memory_space<vmem>>, %arg9: memref<128x1xf32, #tpu.memory_space<vmem>>, %arg10: memref<128x1xi32, #tpu.memory_space<vmem>>, %arg11: memref<128x1xi32, #tpu.memory_space<vmem>>) attributes {dimension_semantics = [#tpu.dimension_semantics<parallel>, #tpu.dimension_semantics<arbitrary>], iteration_bounds = array<i64: 1, 1>, scalar_prefetch = 0 : i64, scratch_operands = 0 : i64, tpu.core_type = #tpu.core_type<tc>, window_params = [{transform_indices = @transform_0, window_bounds = array<i64: 128, 128>}, {transform_indices = @transform_1, window_bounds = array<i64: 128, 128>}, {transform_indices = @transform_2, window_bounds = array<i64: 128, 1>}, {transform_indices = @transform_3, window_bounds = array<i64: 1, 128>}, {transform_indices = @transform_4, window_bounds = array<i64: 128, 1>}, {transform_indices = @transform_5, window_bounds = array<i64: 1, 128>}, {transform_indices = @transform_6, window_bounds = array<i64: 128, 1>}, {transform_indices = @transform_7, window_bounds = array<i64: 128, 1>}, {transform_indices = @transform_8, window_bounds = array<i64: 128, 1>}, {transform_indices = @transform_9, window_bounds = array<i64: 128, 1>}]} {
    %c0_i32 = arith.constant 0 : i32
    %0 = arith.cmpi eq, %arg1, %c0_i32 : i32
    %1 = arith.extui %0 : i1 to i32
    %c0_i32_0 = arith.constant 0 : i32
    %2 = arith.cmpi ne, %1, %c0_i32_0 : i32
    scf.if %2 {
      %cst_43 = arith.constant 0xFF800000 : f32
      %76 = vector.broadcast %cst_43 : f32 to vector<128x1xf32>
      %c0_44 = arith.constant 0 : index
      %c0_45 = arith.constant 0 : index
      %77 = vector.load %arg8[%c0_44, %c0_45] : memref<128x1xf32, #tpu.memory_space<vmem>>, vector<128x1xf32>
      tpu.vector_store %arg8[%c0_44, %c0_45], %76 {strides = array<i32>} : memref<128x1xf32, #tpu.memory_space<vmem>>, vector<128x1xf32>,
      %cst_46 = arith.constant 0x7F800000 : f32
      %78 = vector.broadcast %cst_46 : f32 to vector<128x1xf32>
      %c0_47 = arith.constant 0 : index
      %c0_48 = arith.constant 0 : index
      %79 = vector.load %arg9[%c0_47, %c0_48] : memref<128x1xf32, #tpu.memory_space<vmem>>, vector<128x1xf32>
      tpu.vector_store %arg9[%c0_47, %c0_48], %78 {strides = array<i32>} : memref<128x1xf32, #tpu.memory_space<vmem>>, vector<128x1xf32>,
      %c0_i32_49 = arith.constant 0 : i32
      %80 = vector.broadcast %c0_i32_49 : i32 to vector<128x1xi32>
      %c0_50 = arith.constant 0 : index
      %c0_51 = arith.constant 0 : index
      %81 = vector.load %arg10[%c0_50, %c0_51] : memref<128x1xi32, #tpu.memory_space<vmem>>, vector<128x1xi32>
      tpu.vector_store %arg10[%c0_50, %c0_51], %80 {strides = array<i32>} : memref<128x1xi32, #tpu.memory_space<vmem>>, vector<128x1xi32>,
      %c0_i32_52 = arith.constant 0 : i32
      %82 = vector.broadcast %c0_i32_52 : i32 to vector<128x1xi32>
      %c0_53 = arith.constant 0 : index
      %c0_54 = arith.constant 0 : index
      %83 = vector.load %arg11[%c0_53, %c0_54] : memref<128x1xi32, #tpu.memory_space<vmem>>, vector<128x1xi32>
      tpu.vector_store %arg11[%c0_53, %c0_54], %82 {strides = array<i32>} : memref<128x1xi32, #tpu.memory_space<vmem>>, vector<128x1xi32>,
    } else {
    }
    %c0 = arith.constant 0 : index
    %c0_1 = arith.constant 0 : index
    %3 = vector.load %arg2[%c0, %c0_1] : memref<128x128xf32, #tpu.memory_space<vmem>>, vector<128x128xf32>
    %c0_2 = arith.constant 0 : index
    %c0_3 = arith.constant 0 : index
    %4 = vector.load %arg3[%c0_2, %c0_3] : memref<128x128xf32, #tpu.memory_space<vmem>>, vector<128x128xf32>
    %cst = arith.constant dense<0.000000e+00> : vector<128x128xf32>
    %5 = tpu.matmul %3, %4, %cst {dimension_numbers = #tpu.dot_dimension_numbers<[1], [0], [0], [1], [0, 0, 1, 1], [], []>} : vector<128x128xf32>, vector<128x128xf32>, vector<128x128xf32> -> vector<128x128xf32>
    %c0_4 = arith.constant 0 : index
    %c0_5 = arith.constant 0 : index
    %6 = vector.load %arg4[%c0_4, %c0_5] : memref<128x1xf32, #tpu.memory_space<vmem>>, vector<128x1xf32>
    %c0_6 = arith.constant 0 : index
    %c0_7 = arith.constant 0 : index
    %7 = vector.load %arg5[%c0_6, %c0_7] : memref<1x128xf32, #tpu.memory_space<vmem>>, vector<1x128xf32>
    %8 = vector.broadcast %6 : vector<128x1xf32> to vector<128x128xf32>
    %9 = vector.broadcast %7 : vector<1x128xf32> to vector<128x128xf32>
    %10 = arith.addf %8, %9 : vector<128x128xf32>
    %cst_8 = arith.constant 2.000000e+00 : f32
    %11 = vector.broadcast %cst_8 : f32 to vector<128x128xf32>
    %12 = arith.mulf %11, %5 : vector<128x128xf32>
    %13 = arith.subf %10, %12 : vector<128x128xf32>
    %cst_9 = arith.constant 0.000000e+00 : f32
    %14 = vector.broadcast %cst_9 : f32 to vector<128x128xf32>
    %15 = arith.maximumf %13, %14 : vector<128x128xf32>
    %c128_i32 = arith.constant 128 : i32
    %16 = arith.muli %arg0, %c128_i32 : i32
    %17 = tpu.iota {dimensions = array<i32: 0>} : vector<128x1xi32>
    %18 = vector.broadcast %16 : i32 to vector<128x1xi32>
    %19 = arith.addi %18, %17 : vector<128x1xi32>
    %c128_i32_10 = arith.constant 128 : i32
    %20 = arith.muli %arg1, %c128_i32_10 : i32
    %21 = tpu.iota {dimensions = array<i32: 1>} : vector<1x128xi32>
    %22 = vector.broadcast %20 : i32 to vector<1x128xi32>
    %23 = arith.addi %22, %21 : vector<1x128xi32>
    %24 = arith.sitofp %23 : vector<1x128xi32> to vector<1x128xf32>
    %c0_11 = arith.constant 0 : index
    %c0_12 = arith.constant 0 : index
    %25 = vector.load %arg6[%c0_11, %c0_12] : memref<128x1xi32, #tpu.memory_space<vmem>>, vector<128x1xi32>
    %c0_13 = arith.constant 0 : index
    %c0_14 = arith.constant 0 : index
    %26 = vector.load %arg7[%c0_13, %c0_14] : memref<1x128xi32, #tpu.memory_space<vmem>>, vector<1x128xi32>
    %27 = vector.broadcast %25 : vector<128x1xi32> to vector<128x128xi32>
    %28 = vector.broadcast %26 : vector<1x128xi32> to vector<128x128xi32>
    %29 = arith.cmpi eq, %27, %28 : vector<128x128xi32>
    %30 = vector.broadcast %19 : vector<128x1xi32> to vector<128x128xi32>
    %31 = vector.broadcast %23 : vector<1x128xi32> to vector<128x128xi32>
    %32 = arith.cmpi ne, %30, %31 : vector<128x128xi32>
    %33 = arith.andi %29, %32 : vector<128x128xi1>
    %cst_15 = arith.constant 0xFF800000 : f32
    %34 = vector.broadcast %cst_15 : f32 to vector<128x128xf32>
    %35 = arith.select %33, %15, %34 : vector<128x128xi1>, vector<128x128xf32>
    %cst_16 = arith.constant dense<0xFF800000> : vector<128xf32>
    %36 = vector.multi_reduction <maximumf>, %35, %cst_16 [1] : vector<128x128xf32> to vector<128xf32>
    %37 = vector.shape_cast %36 : vector<128xf32> to vector<128x1xf32>
    %38 = vector.broadcast %37 : vector<128x1xf32> to vector<128x128xf32>
    %39 = arith.cmpf oeq, %35, %38 : vector<128x128xf32>
    %cst_17 = arith.constant 1.000000e+09 : f32
    %40 = vector.shape_cast %24 : vector<1x128xf32> to vector<1x128xf32>
    %41 = vector.broadcast %40 : vector<1x128xf32> to vector<128x128xf32>
    %42 = vector.broadcast %cst_17 : f32 to vector<128x128xf32>
    %43 = arith.select %39, %41, %42 : vector<128x128xi1>, vector<128x128xf32>
    %cst_18 = arith.constant dense<0x7F800000> : vector<128xf32>
    %44 = vector.multi_reduction <minimumf>, %43, %cst_18 [1] : vector<128x128xf32> to vector<128xf32>
    %45 = vector.shape_cast %44 : vector<128xf32> to vector<128x1xf32>
    %c0_19 = arith.constant 0 : index
    %c0_20 = arith.constant 0 : index
    %46 = vector.load %arg8[%c0_19, %c0_20] : memref<128x1xf32, #tpu.memory_space<vmem>>, vector<128x1xf32>
    %47 = arith.cmpf ogt, %37, %46 : vector<128x1xf32>
    %48 = arith.fptosi %45 : vector<128x1xf32> to vector<128x1xi32>
    %c0_21 = arith.constant 0 : index
    %c0_22 = arith.constant 0 : index
    %49 = vector.load %arg10[%c0_21, %c0_22] : memref<128x1xi32, #tpu.memory_space<vmem>>, vector<128x1xi32>
    %50 = arith.select %47, %48, %49 : vector<128x1xi1>, vector<128x1xi32>
    %c0_23 = arith.constant 0 : index
    %c0_24 = arith.constant 0 : index
    %51 = vector.load %arg10[%c0_23, %c0_24] : memref<128x1xi32, #tpu.memory_space<vmem>>, vector<128x1xi32>
    tpu.vector_store %arg10[%c0_23, %c0_24], %50 {strides = array<i32>} : memref<128x1xi32, #tpu.memory_space<vmem>>, vector<128x1xi32>,
    %c0_25 = arith.constant 0 : index
    %c0_26 = arith.constant 0 : index
    %52 = vector.load %arg8[%c0_25, %c0_26] : memref<128x1xf32, #tpu.memory_space<vmem>>, vector<128x1xf32>
    %53 = arith.select %47, %37, %52 : vector<128x1xi1>, vector<128x1xf32>
    %c0_27 = arith.constant 0 : index
    %c0_28 = arith.constant 0 : index
    %54 = vector.load %arg8[%c0_27, %c0_28] : memref<128x1xf32, #tpu.memory_space<vmem>>, vector<128x1xf32>
    tpu.vector_store %arg8[%c0_27, %c0_28], %53 {strides = array<i32>} : memref<128x1xf32, #tpu.memory_space<vmem>>, vector<128x1xf32>,
    %cst_29 = arith.constant 0x7F800000 : f32
    %55 = vector.broadcast %cst_29 : f32 to vector<128x128xf32>
    %56 = arith.select %29, %55, %15 : vector<128x128xi1>, vector<128x128xf32>
    %cst_30 = arith.constant dense<0x7F800000> : vector<128xf32>
    %57 = vector.multi_reduction <minimumf>, %56, %cst_30 [1] : vector<128x128xf32> to vector<128xf32>
    %58 = vector.shape_cast %57 : vector<128xf32> to vector<128x1xf32>
    %59 = vector.broadcast %58 : vector<128x1xf32> to vector<128x128xf32>
    %60 = arith.cmpf oeq, %56, %59 : vector<128x128xf32>
    %cst_31 = arith.constant 1.000000e+09 : f32
    %61 = vector.shape_cast %24 : vector<1x128xf32> to vector<1x128xf32>
    %62 = vector.broadcast %61 : vector<1x128xf32> to vector<128x128xf32>
    %63 = vector.broadcast %cst_31 : f32 to vector<128x128xf32>
    %64 = arith.select %60, %62, %63 : vector<128x128xi1>, vector<128x128xf32>
    %cst_32 = arith.constant dense<0x7F800000> : vector<128xf32>
    %65 = vector.multi_reduction <minimumf>, %64, %cst_32 [1] : vector<128x128xf32> to vector<128xf32>
    %66 = vector.shape_cast %65 : vector<128xf32> to vector<128x1xf32>
    %c0_33 = arith.constant 0 : index
    %c0_34 = arith.constant 0 : index
    %67 = vector.load %arg9[%c0_33, %c0_34] : memref<128x1xf32, #tpu.memory_space<vmem>>, vector<128x1xf32>
    %68 = arith.cmpf olt, %58, %67 : vector<128x1xf32>
    %69 = arith.fptosi %66 : vector<128x1xf32> to vector<128x1xi32>
    %c0_35 = arith.constant 0 : index
    %c0_36 = arith.constant 0 : index
    %70 = vector.load %arg11[%c0_35, %c0_36] : memref<128x1xi32, #tpu.memory_space<vmem>>, vector<128x1xi32>
    %71 = arith.select %68, %69, %70 : vector<128x1xi1>, vector<128x1xi32>
    %c0_37 = arith.constant 0 : index
    %c0_38 = arith.constant 0 : index
    %72 = vector.load %arg11[%c0_37, %c0_38] : memref<128x1xi32, #tpu.memory_space<vmem>>, vector<128x1xi32>
    tpu.vector_store %arg11[%c0_37, %c0_38], %71 {strides = array<i32>} : memref<128x1xi32, #tpu.memory_space<vmem>>, vector<128x1xi32>,
    %c0_39 = arith.constant 0 : index
    %c0_40 = arith.constant 0 : index
    %73 = vector.load %arg9[%c0_39, %c0_40] : memref<128x1xf32, #tpu.memory_space<vmem>>, vector<128x1xf32>
    %74 = arith.select %68, %58, %73 : vector<128x1xi1>, vector<128x1xf32>
    %c0_41 = arith.constant 0 : index
    %c0_42 = arith.constant 0 : index
    %75 = vector.load %arg9[%c0_41, %c0_42] : memref<128x1xf32, #tpu.memory_space<vmem>>, vector<128x1xf32>
    tpu.vector_store %arg9[%c0_41, %c0_42], %74 {strides = array<i32>} : memref<128x1xf32, #tpu.memory_space<vmem>>, vector<128x1xf32>,
    return
  }
  func.func @transform_0(%arg0: i32, %arg1: i32) -> (i32, i32) {
    %c0_i32 = arith.constant 0 : i32
    %c0_i32_0 = arith.constant 0 : i32
    return %arg0, %c0_i32 : i32, i32
  }
  func.func @transform_1(%arg0: i32, %arg1: i32) -> (i32, i32) {
    %c0_i32 = arith.constant 0 : i32
    %c0_i32_0 = arith.constant 0 : i32
    return %c0_i32, %arg1 : i32, i32
  }
  func.func @transform_2(%arg0: i32, %arg1: i32) -> (i32, i32) {
    %c0_i32 = arith.constant 0 : i32
    %c0_i32_0 = arith.constant 0 : i32
    return %arg0, %c0_i32 : i32, i32
  }
  func.func @transform_3(%arg0: i32, %arg1: i32) -> (i32, i32) {
    %c0_i32 = arith.constant 0 : i32
    %c0_i32_0 = arith.constant 0 : i32
    return %c0_i32, %arg1 : i32, i32
  }
  func.func @transform_4(%arg0: i32, %arg1: i32) -> (i32, i32) {
    %c0_i32 = arith.constant 0 : i32
    %c0_i32_0 = arith.constant 0 : i32
    return %arg0, %c0_i32 : i32, i32
  }
  func.func @transform_5(%arg0: i32, %arg1: i32) -> (i32, i32) {
    %c0_i32 = arith.constant 0 : i32
    %c0_i32_0 = arith.constant 0 : i32
    return %c0_i32, %arg1 : i32, i32
  }
  func.func @transform_6(%arg0: i32, %arg1: i32) -> (i32, i32) {
    %c0_i32 = arith.constant 0 : i32
    %c0_i32_0 = arith.constant 0 : i32
    return %arg0, %c0_i32 : i32, i32
  }
  func.func @transform_7(%arg0: i32, %arg1: i32) -> (i32, i32) {
    %c0_i32 = arith.constant 0 : i32
    %c0_i32_0 = arith.constant 0 : i32
    return %arg0, %c0_i32 : i32, i32
  }
  func.func @transform_8(%arg0: i32, %arg1: i32) -> (i32, i32) {
    %c0_i32 = arith.constant 0 : i32
    %c0_i32_0 = arith.constant 0 : i32
    return %arg0, %c0_i32 : i32, i32
  }
  func.func @transform_9(%arg0: i32, %arg1: i32) -> (i32, i32) {
    %c0_i32 = arith.constant 0 : i32
    %c0_i32_0 = arith.constant 0 : i32
    return %arg0, %c0_i32 : i32, i32
  }
}

</mosaic_0001>

<llo_original>
// kernel: tpu_custom_call.1
$region0: #{tpu_custom_call.1}
  #allocation0 [shape = 'u32[]', space=smem, size = 0x4, offset = 0x4, fixed_abs, tag = 'smem constant byte address 0x4 - core index']
  #allocation1 [shape = 'u32[144,128]{1,0:T(1,128)}', space=vmem, size = 0x12000, scoped, tag = 'internal scratch']
  %s0 = inlined_call_operand.vmem [shape: f32[128,128], index: 0, kind: input, shape index: {}]
  %s1 = inlined_call_operand.vmem [shape: f32[128,128], index: 1, kind: input, shape index: {}]
  %s2 = inlined_call_operand.vmem [shape: f32[128,1], index: 2, kind: input, shape index: {}]
  %s3 = inlined_call_operand.vmem [shape: f32[1,128], index: 3, kind: input, shape index: {}]
  %s4 = inlined_call_operand.vmem [shape: s32[128,1], index: 4, kind: input, shape index: {}]
  %s5 = inlined_call_operand.vmem [shape: s32[1,128], index: 5, kind: input, shape index: {}]
  %s6 = inlined_call_operand.vmem [shape: f32[128,1], index: 6, kind: output, shape index: {0}]
  %s7 = inlined_call_operand.vmem [shape: f32[128,1], index: 7, kind: output, shape index: {1}]
  %s8 = inlined_call_operand.vmem [shape: s32[128,1], index: 8, kind: output, shape index: {2}]
  %s9 = inlined_call_operand.vmem [shape: s32[128,1], index: 9, kind: output, shape index: {3}]
  %10 = xla_tuple %s6, %s7, %s8, %s9
  %s11 = sld [smem:[#allocation0]]
  $region62: #{tpu_custom_call.1} parent=0
    _
  %s13 = ssub.s32 1, %s11
  %s14 = scalar_select 0, %s13, %s11
  // Predicated region
  $region2: #{tpu_custom_call.1} parent=0 // pred_check
    _
  $region3: #{tpu_custom_call.1} parent=0 // pred_check_branch
    %16 = sbr.rel (0) target = $region5
  $region4: #{tpu_custom_call.1} parent=0 // pred_region
    _
  $region5: #{tpu_custom_call.1} parent=0 // pred_fallthru
    _
  // Predicated region
  $region6: #{tpu_custom_call.1} parent=0 // pred_check
    _
  $region7: #{tpu_custom_call.1} parent=0 // pred_check_branch
    %18 = sbr.rel (0) target = $region9
  $region8: #{tpu_custom_call.1} parent=0 // pred_region
    _
  $region9: #{tpu_custom_call.1} parent=0 // pred_fallthru
    _
  // Predicated region
  $region10: #{tpu_custom_call.1} parent=0 // pred_check
    _
  $region11: #{tpu_custom_call.1} parent=0 // pred_check_branch
    %20 = sbr.rel (0) target = $region13
  $region12: #{tpu_custom_call.1} parent=0 // pred_region
    _
  $region13: #{tpu_custom_call.1} parent=0 // pred_fallthru
    _
  // Predicated region
  $region14: #{tpu_custom_call.1} parent=0 // pred_check
    _
  $region15: #{tpu_custom_call.1} parent=0 // pred_check_branch
    %22 = sbr.rel (0) target = $region17
  $region16: #{tpu_custom_call.1} parent=0 // pred_region
    _
  $region17: #{tpu_custom_call.1} parent=0 // pred_fallthru
    _
  // Predicated region
  $region18: #{tpu_custom_call.1} parent=0 // pred_check
    _
  $region19: #{tpu_custom_call.1} parent=0 // pred_check_branch
    %24 = sbr.rel (0) target = $region21
  $region20: #{tpu_custom_call.1} parent=0 // pred_region
    _
  $region21: #{tpu_custom_call.1} parent=0 // pred_fallthru
    _
  // Predicated region
  $region22: #{tpu_custom_call.1} parent=0 // pred_check
    _
  $region23: #{tpu_custom_call.1} parent=0 // pred_check_branch
    %26 = sbr.rel (0) target = $region25
  $region24: #{tpu_custom_call.1} parent=0 // pred_region
    _
  $region25: #{tpu_custom_call.1} parent=0 // pred_fallthru
    _
  %p27 = scmp.eq.s32.totalorder 0, 0
  // Predicated region
  $region26: #{tpu_custom_call.1} parent=0 // pred_check
    %p28 = pneg %p27
  $region27: #{tpu_custom_call.1} parent=0 // pred_check_branch
    %30 = sbr.rel (%p28) target = $region29
  $region28: #{tpu_custom_call.1} parent=0 // pred_region
    %vm31 = vcmask 7168
    %32 = vst.msk [vmem:[%s6] sm:$0xff] %vm31, -inf
    %33 = vst.msk [vmem:[%s6 + $0x8] sm:$0xff] %vm31, -inf
    %34 = vst.msk [vmem:[%s6 + $0x10] sm:$0xff] %vm31, -inf
    %35 = vst.msk [vmem:[%s6 + $0x18] sm:$0xff] %vm31, -inf
    %36 = vst.msk [vmem:[%s6 + $0x20] sm:$0xff] %vm31, -inf
    %37 = vst.msk [vmem:[%s6 + $0x28] sm:$0xff] %vm31, -inf
    %38 = vst.msk [vmem:[%s6 + $0x30] sm:$0xff] %vm31, -inf
    %39 = vst.msk [vmem:[%s6 + $0x38] sm:$0xff] %vm31, -inf
    %40 = vst.msk [vmem:[%s6 + $0x40] sm:$0xff] %vm31, -inf
    %41 = vst.msk [vmem:[%s6 + $0x48] sm:$0xff] %vm31, -inf
    %42 = vst.msk [vmem:[%s6 + $0x50] sm:$0xff] %vm31, -inf
    %43 = vst.msk [vmem:[%s6 + $0x58] sm:$0xff] %vm31, -inf
    %44 = vst.msk [vmem:[%s6 + $0x60] sm:$0xff] %vm31, -inf
    %45 = vst.msk [vmem:[%s6 + $0x68] sm:$0xff] %vm31, -inf
    %46 = vst.msk [vmem:[%s6 + $0x70] sm:$0xff] %vm31, -inf
    %47 = vst.msk [vmem:[%s6 + $0x78] sm:$0xff] %vm31, -inf
    %48 = vst.msk [vmem:[%s7] sm:$0xff] %vm31, inf
    %49 = vst.msk [vmem:[%s7 + $0x8] sm:$0xff] %vm31, inf
    %50 = vst.msk [vmem:[%s7 + $0x10] sm:$0xff] %vm31, inf
    %51 = vst.msk [vmem:[%s7 + $0x18] sm:$0xff] %vm31, inf
    %52 = vst.msk [vmem:[%s7 + $0x20] sm:$0xff] %vm31, inf
    %53 = vst.msk [vmem:[%s7 + $0x28] sm:$0xff] %vm31, inf
    %54 = vst.msk [vmem:[%s7 + $0x30] sm:$0xff] %vm31, inf
    %55 = vst.msk [vmem:[%s7 + $0x38] sm:$0xff] %vm31, inf
    %56 = vst.msk [vmem:[%s7 + $0x40] sm:$0xff] %vm31, inf
    %57 = vst.msk [vmem:[%s7 + $0x48] sm:$0xff] %vm31, inf
    %58 = vst.msk [vmem:[%s7 + $0x50] sm:$0xff] %vm31, inf
    %59 = vst.msk [vmem:[%s7 + $0x58] sm:$0xff] %vm31, inf
    %60 = vst.msk [vmem:[%s7 + $0x60] sm:$0xff] %vm31, inf
    %61 = vst.msk [vmem:[%s7 + $0x68] sm:$0xff] %vm31, inf
    %62 = vst.msk [vmem:[%s7 + $0x70] sm:$0xff] %vm31, inf
    %63 = vst.msk [vmem:[%s7 + $0x78] sm:$0xff] %vm31, inf
    %64 = vst.msk [vmem:[%s8] sm:$0xff] %vm31, 0
    %65 = vst.msk [vmem:[%s8 + $0x8] sm:$0xff] %vm31, 0
    %66 = vst.msk [vmem:[%s8 + $0x10] sm:$0xff] %vm31, 0
    %67 = vst.msk [vmem:[%s8 + $0x18] sm:$0xff] %vm31, 0
    %68 = vst.msk [vmem:[%s8 + $0x20] sm:$0xff] %vm31, 0
    %69 = vst.msk [vmem:[%s8 + $0x28] sm:$0xff] %vm31, 0
    %70 = vst.msk [vmem:[%s8 + $0x30] sm:$0xff] %vm31, 0
    %71 = vst.msk [vmem:[%s8 + $0x38] sm:$0xff] %vm31, 0
    %72 = vst.msk [vmem:[%s8 + $0x40] sm:$0xff] %vm31, 0
    %73 = vst.msk [vmem:[%s8 + $0x48] sm:$0xff] %vm31, 0
    %74 = vst.msk [vmem:[%s8 + $0x50] sm:$0xff] %vm31, 0
    %75 = vst.msk [vmem:[%s8 + $0x58] sm:$0xff] %vm31, 0
    %76 = vst.msk [vmem:[%s8 + $0x60] sm:$0xff] %vm31, 0
    %77 = vst.msk [vmem:[%s8 + $0x68] sm:$0xff] %vm31, 0
    %78 = vst.msk [vmem:[%s8 + $0x70] sm:$0xff] %vm31, 0
    %79 = vst.msk [vmem:[%s8 + $0x78] sm:$0xff] %vm31, 0
    %80 = vst.msk [vmem:[%s9] sm:$0xff] %vm31, 0
    %81 = vst.msk [vmem:[%s9 + $0x8] sm:$0xff] %vm31, 0
    %82 = vst.msk [vmem:[%s9 + $0x10] sm:$0xff] %vm31, 0
    %83 = vst.msk [vmem:[%s9 + $0x18] sm:$0xff] %vm31, 0
    %84 = vst.msk [vmem:[%s9 + $0x20] sm:$0xff] %vm31, 0
    %85 = vst.msk [vmem:[%s9 + $0x28] sm:$0xff] %vm31, 0
    %86 = vst.msk [vmem:[%s9 + $0x30] sm:$0xff] %vm31, 0
    %87 = vst.msk [vmem:[%s9 + $0x38] sm:$0xff] %vm31, 0
    %88 = vst.msk [vmem:[%s9 + $0x40] sm:$0xff] %vm31, 0
    %89 = vst.msk [vmem:[%s9 + $0x48] sm:$0xff] %vm31, 0
    %90 = vst.msk [vmem:[%s9 + $0x50] sm:$0xff] %vm31, 0
    %91 = vst.msk [vmem:[%s9 + $0x58] sm:$0xff] %vm31, 0
    %92 = vst.msk [vmem:[%s9 + $0x60] sm:$0xff] %vm31, 0
    %93 = vst.msk [vmem:[%s9 + $0x68] sm:$0xff] %vm31, 0
    %94 = vst.msk [vmem:[%s9 + $0x70] sm:$0xff] %vm31, 0
    %95 = vst.msk [vmem:[%s9 + $0x78] sm:$0xff] %vm31, 0
  $region29: #{tpu_custom_call.1} parent=0 // pred_fallthru
    _
  %v96 = vld [vmem:[%s0] sm:$0xff]
  %v97 = vld [vmem:[%s0 + $0x8] sm:$0xff]
  %v98 = vld [vmem:[%s0 + $0x10] sm:$0xff]
  %v99 = vld [vmem:[%s0 + $0x18] sm:$0xff]
  %v100 = vld [vmem:[%s0 + $0x20] sm:$0xff]
  %v101 = vld [vmem:[%s0 + $0x28] sm:$0xff]
  %v102 = vld [vmem:[%s0 + $0x30] sm:$0xff]
  %v103 = vld [vmem:[%s0 + $0x38] sm:$0xff]
  %v104 = vld [vmem:[%s0 + $0x40] sm:$0xff]
  %v105 = vld [vmem:[%s0 + $0x48] sm:$0xff]
  %v106 = vld [vmem:[%s0 + $0x50] sm:$0xff]
  %v107 = vld [vmem:[%s0 + $0x58] sm:$0xff]
  %v108 = vld [vmem:[%s0 + $0x60] sm:$0xff]
  %v109 = vld [vmem:[%s0 + $0x68] sm:$0xff]
  %v110 = vld [vmem:[%s0 + $0x70] sm:$0xff]
  %v111 = vld [vmem:[%s0 + $0x78] sm:$0xff]
  %v112 = vld [vmem:[%s1] sm:$0xff]
  %v113 = vld [vmem:[%s1 + $0x8] sm:$0xff]
  %v114 = vld [vmem:[%s1 + $0x10] sm:$0xff]
  %v115 = vld [vmem:[%s1 + $0x18] sm:$0xff]
  %v116 = vld [vmem:[%s1 + $0x20] sm:$0xff]
  %v117 = vld [vmem:[%s1 + $0x28] sm:$0xff]
  %v118 = vld [vmem:[%s1 + $0x30] sm:$0xff]
  %v119 = vld [vmem:[%s1 + $0x38] sm:$0xff]
  %v120 = vld [vmem:[%s1 + $0x40] sm:$0xff]
  %v121 = vld [vmem:[%s1 + $0x48] sm:$0xff]
  %v122 = vld [vmem:[%s1 + $0x50] sm:$0xff]
  %v123 = vld [vmem:[%s1 + $0x58] sm:$0xff]
  %v124 = vld [vmem:[%s1 + $0x60] sm:$0xff]
  %v125 = vld [vmem:[%s1 + $0x68] sm:$0xff]
  %v126 = vld [vmem:[%s1 + $0x70] sm:$0xff]
  %v127 = vld [vmem:[%s1 + $0x78] sm:$0xff]
  %128 = vmatprep.subr.mxu0 0.0
  %129 = vmatpush1.msra.mxu0 %v112
  %130 = vmatprep.subr.mxu0 0.0
  %131 = vmatpush1.msra.mxu0 %v113
  %132 = vmatprep.subr.mxu0 0.0
  %133 = vmatpush1.msra.mxu0 %v114
  %134 = vmatprep.subr.mxu0 0.0
  %135 = vmatpush1.msra.mxu0 %v115
  %136 = vmatprep.subr.mxu0 0.0
  %137 = vmatpush1.msra.mxu0 %v116
  %138 = vmatprep.subr.mxu0 0.0
  %139 = vmatpush1.msra.mxu0 %v117
  %140 = vmatprep.subr.mxu0 0.0
  %141 = vmatpush1.msra.mxu0 %v118
  %142 = vmatprep.subr.mxu0 0.0
  %143 = vmatpush1.msra.mxu0 %v119
  %144 = vmatprep.subr.mxu0 0.0
  %145 = vmatpush1.msra.mxu0 %v120
  %146 = vmatprep.subr.mxu0 0.0
  %147 = vmatpush1.msra.mxu0 %v121
  %148 = vmatprep.subr.mxu0 0.0
  %149 = vmatpush1.msra.mxu0 %v122
  %150 = vmatprep.subr.mxu0 0.0
  %151 = vmatpush1.msra.mxu0 %v123
  %152 = vmatprep.subr.mxu0 0.0
  %153 = vmatpush1.msra.mxu0 %v124
  %154 = vmatprep.subr.mxu0 0.0
  %155 = vmatpush1.msra.mxu0 %v125
  %156 = vmatprep.subr.mxu0 0.0
  %157 = vmatpush1.msra.mxu0 %v126
  %158 = vmatprep.subr.mxu0 0.0
  %159 = vmatpush1.msra.mxu0 %v127
  %160 = vmatprep.subr.mxu0 0.0
  %161 = vmatpush1.msra.mxu0 0.0
  %162 = vmatprep.subr.mxu0 0.0
  %163 = vmatpush1.msra.mxu0 0.0
  %164 = vmatprep.subr.mxu0 0.0
  %165 = vmatpush1.msra.mxu0 0.0
  %166 = vmatprep.subr.mxu0 0.0
  %167 = vmatpush1.msra.mxu0 0.0
  %168 = vmatprep.subr.mxu0 0.0
  %169 = vmatpush1.msra.mxu0 0.0
  %170 = vmatprep.subr.mxu0 0.0
  %171 = vmatpush1.msra.mxu0 0.0
  %172 = vmatprep.subr.mxu0 0.0
  %173 = vmatpush1.msra.mxu0 0.0
  %174 = vmatprep.subr.mxu0 0.0
  %175 = vmatpush1.msra.mxu0 0.0
  %176 = vmatprep.subr.mxu0 0.0
  %177 = vmatpush1.msra.mxu0 0.0
  %178 = vmatprep.subr.mxu0 0.0
  %179 = vmatpush1.msra.mxu0 0.0
  %180 = vmatprep.subr.mxu0 0.0
  %181 = vmatpush1.msra.mxu0 0.0
  %182 = vmatprep.subr.mxu0 0.0
  %183 = vmatpush1.msra.mxu0 0.0
  %184 = vmatprep.subr.mxu0 0.0
  %185 = vmatpush1.msra.mxu0 0.0
  %186 = vmatprep.subr.mxu0 0.0
  %187 = vmatpush1.msra.mxu0 0.0
  %188 = vmatprep.subr.mxu0 0.0
  %189 = vmatpush1.msra.mxu0 0.0
  %190 = vmatprep.subr.mxu0 0.0
  %191 = vmatpush1.msra.mxu0 0.0
  %192 = vmatprep.mubr.f32.mxu0 0.0
  %193 = vmatmul.mubr.f32.gmra.mrb[0].mxu0 %v96
  %v194 = vpop.f32.mrb[0].mxu0
  %v195 = vadd.f32 0.0, %v194
  %v196 = vpop.f32.mrb[0].mxu0
  %197 = vmatprep.mubr.f32.mxu0 0.0
  %198 = vmatmul.mubr.f32.gmra.mrb[0].mxu0 %v97
  %v199 = vpop.f32.mrb[0].mxu0
  %v200 = vadd.f32 0.0, %v199
  %v201 = vpop.f32.mrb[0].mxu0
  %202 = vmatprep.mubr.f32.mxu0 0.0
  %203 = vmatmul.mubr.f32.gmra.mrb[0].mxu0 %v98
  %v204 = vpop.f32.mrb[0].mxu0
  %v205 = vadd.f32 0.0, %v204
  %v206 = vpop.f32.mrb[0].mxu0
  %207 = vmatprep.mubr.f32.mxu0 0.0
  %208 = vmatmul.mubr.f32.gmra.mrb[0].mxu0 %v99
  %v209 = vpop.f32.mrb[0].mxu0
  %v210 = vadd.f32 0.0, %v209
  %v211 = vpop.f32.mrb[0].mxu0
  %212 = vmatprep.mubr.f32.mxu0 0.0
  %213 = vmatmul.mubr.f32.gmra.mrb[0].mxu0 %v100
  %v214 = vpop.f32.mrb[0].mxu0
  %v215 = vadd.f32 0.0, %v214
  %v216 = vpop.f32.mrb[0].mxu0
  %217 = vmatprep.mubr.f32.mxu0 0.0
  %218 = vmatmul.mubr.f32.gmra.mrb[0].mxu0 %v101
  %v219 = vpop.f32.mrb[0].mxu0
  %v220 = vadd.f32 0.0, %v219
  %v221 = vpop.f32.mrb[0].mxu0
  %222 = vmatprep.mubr.f32.mxu0 0.0
  %223 = vmatmul.mubr.f32.gmra.mrb[0].mxu0 %v102
  %v224 = vpop.f32.mrb[0].mxu0
  %v225 = vadd.f32 0.0, %v224
  %v226 = vpop.f32.mrb[0].mxu0
  %227 = vmatprep.mubr.f32.mxu0 0.0
  %228 = vmatmul.mubr.f32.gmra.mrb[0].mxu0 %v103
  %v229 = vpop.f32.mrb[0].mxu0
  %v230 = vadd.f32 0.0, %v229
  %v231 = vpop.f32.mrb[0].mxu0
  %232 = vmatprep.mubr.f32.mxu0 0.0
  %233 = vmatmul.mubr.f32.gmra.mrb[0].mxu0 %v104
  %v234 = vpop.f32.mrb[0].mxu0
  %v235 = vadd.f32 0.0, %v234
  %v236 = vpop.f32.mrb[0].mxu0
  %237 = vmatprep.mubr.f32.mxu0 0.0
  %238 = vmatmul.mubr.f32.gmra.mrb[0].mxu0 %v105
  %v239 = vpop.f32.mrb[0].mxu0
  %v240 = vadd.f32 0.0, %v239
  %v241 = vpop.f32.mrb[0].mxu0
  %242 = vmatprep.mubr.f32.mxu0 0.0
  %243 = vmatmul.mubr.f32.gmra.mrb[0].mxu0 %v106
  %v244 = vpop.f32.mrb[0].mxu0
  %v245 = vadd.f32 0.0, %v244
  %v246 = vpop.f32.mrb[0].mxu0
  %247 = vmatprep.mubr.f32.mxu0 0.0
  %248 = vmatmul.mubr.f32.gmra.mrb[0].mxu0 %v107
  %v249 = vpop.f32.mrb[0].mxu0
  %v250 = vadd.f32 0.0, %v249
  %v251 = vpop.f32.mrb[0].mxu0
  %252 = vmatprep.mubr.f32.mxu0 0.0
  %253 = vmatmul.mubr.f32.gmra.mrb[0].mxu0 %v108
  %v254 = vpop.f32.mrb[0].mxu0
  %v255 = vadd.f32 0.0, %v254
  %v256 = vpop.f32.mrb[0].mxu0
  %257 = vmatprep.mubr.f32.mxu0 0.0
  %258 = vmatmul.mubr.f32.gmra.mrb[0].mxu0 %v109
  %v259 = vpop.f32.mrb[0].mxu0
  %v260 = vadd.f32 0.0, %v259
  %v261 = vpop.f32.mrb[0].mxu0
  %262 = vmatprep.mubr.f32.mxu0 0.0
  %263 = vmatmul.mubr.f32.gmra.mrb[0].mxu0 %v110
  %v264 = vpop.f32.mrb[0].mxu0
  %v265 = vadd.f32 0.0, %v264
  %v266 = vpop.f32.mrb[0].mxu0
  %267 = vmatprep.mubr.f32.mxu0 0.0
  %268 = vmatmul.mubr.f32.gmra.mrb[0].mxu0 %v111
  %v269 = vpop.f32.mrb[0].mxu0
  %v270 = vadd.f32 0.0, %v269
  %v271 = vpop.f32.mrb[0].mxu0
  %272 = vdwg.mxu0
  %v273 = vld [vmem:[%s2] sm:$0xff]
  %v274 = vld [vmem:[%s2 + $0x8] sm:$0xff]
  %v275 = vld [vmem:[%s2 + $0x10] sm:$0xff]
  %v276 = vld [vmem:[%s2 + $0x18] sm:$0xff]
  %v277 = vld [vmem:[%s2 + $0x20] sm:$0xff]
  %v278 = vld [vmem:[%s2 + $0x28] sm:$0xff]
  %v279 = vld [vmem:[%s2 + $0x30] sm:$0xff]
  %v280 = vld [vmem:[%s2 + $0x38] sm:$0xff]
  %v281 = vld [vmem:[%s2 + $0x40] sm:$0xff]
  %v282 = vld [vmem:[%s2 + $0x48] sm:$0xff]
  %v283 = vld [vmem:[%s2 + $0x50] sm:$0xff]
  %v284 = vld [vmem:[%s2 + $0x58] sm:$0xff]
  %v285 = vld [vmem:[%s2 + $0x60] sm:$0xff]
  %v286 = vld [vmem:[%s2 + $0x68] sm:$0xff]
  %v287 = vld [vmem:[%s2 + $0x70] sm:$0xff]
  %v288 = vld [vmem:[%s2 + $0x78] sm:$0xff]
  %v289 = vld [vmem:[%s3] sm:$0x1]
  %291 = vset.pattern.permute.xlu0 0
  %292 = vperm.xlu0 %291, %v273
  %v293 = vpop.permute.xlu0 %292
  %296 = vset.pattern.permute.xlu0 0
  %297 = vperm.xlu0 %296, %v274
  %v298 = vpop.permute.xlu0 %297
  %301 = vset.pattern.permute.xlu0 0
  %302 = vperm.xlu0 %301, %v275
  %v303 = vpop.permute.xlu0 %302
  %306 = vset.pattern.permute.xlu0 0
  %307 = vperm.xlu0 %306, %v276
  %v308 = vpop.permute.xlu0 %307
  %311 = vset.pattern.permute.xlu0 0
  %312 = vperm.xlu0 %311, %v277
  %v313 = vpop.permute.xlu0 %312
  %316 = vset.pattern.permute.xlu0 0
  %317 = vperm.xlu0 %316, %v278
  %v318 = vpop.permute.xlu0 %317
  %321 = vset.pattern.permute.xlu0 0
  %322 = vperm.xlu0 %321, %v279
  %v323 = vpop.permute.xlu0 %322
  %326 = vset.pattern.permute.xlu0 0
  %327 = vperm.xlu0 %326, %v280
  %v328 = vpop.permute.xlu0 %327
  %331 = vset.pattern.permute.xlu0 0
  %332 = vperm.xlu0 %331, %v281
  %v333 = vpop.permute.xlu0 %332
  %336 = vset.pattern.permute.xlu0 0
  %337 = vperm.xlu0 %336, %v282
  %v338 = vpop.permute.xlu0 %337
  %341 = vset.pattern.permute.xlu0 0
  %342 = vperm.xlu0 %341, %v283
  %v343 = vpop.permute.xlu0 %342
  %346 = vset.pattern.permute.xlu0 0
  %347 = vperm.xlu0 %346, %v284
  %v348 = vpop.permute.xlu0 %347
  %351 = vset.pattern.permute.xlu0 0
  %352 = vperm.xlu0 %351, %v285
  %v353 = vpop.permute.xlu0 %352
  %356 = vset.pattern.permute.xlu0 0
  %357 = vperm.xlu0 %356, %v286
  %v358 = vpop.permute.xlu0 %357
  %361 = vset.pattern.permute.xlu0 0
  %362 = vperm.xlu0 %361, %v287
  %v363 = vpop.permute.xlu0 %362
  %366 = vset.pattern.permute.xlu0 0
  %367 = vperm.xlu0 %366, %v288
  %v368 = vpop.permute.xlu0 %367
  %v371 = vlaneseq
  %v372 = vshrl.u32 %v371, 7
  %v373 = vsub.s32 0, %v372
  %v374 = vrot.slane %v289, %v373
  %v376 = vadd.f32 %v293, %v374
  %v377 = vadd.f32 %v298, %v374
  %v378 = vadd.f32 %v303, %v374
  %v379 = vadd.f32 %v308, %v374
  %v380 = vadd.f32 %v313, %v374
  %v381 = vadd.f32 %v318, %v374
  %v382 = vadd.f32 %v323, %v374
  %v383 = vadd.f32 %v328, %v374
  %v384 = vadd.f32 %v333, %v374
  %v385 = vadd.f32 %v338, %v374
  %v386 = vadd.f32 %v343, %v374
  %v387 = vadd.f32 %v348, %v374
  %v388 = vadd.f32 %v353, %v374
  %v389 = vadd.f32 %v358, %v374
  %v390 = vadd.f32 %v363, %v374
  %v391 = vadd.f32 %v368, %v374
  %v392 = vmul.f32 %v195, 2.0
  %v393 = vmul.f32 %v200, 2.0
  %v394 = vmul.f32 %v205, 2.0
  %v395 = vmul.f32 %v210, 2.0
  %v396 = vmul.f32 %v215, 2.0
  %v397 = vmul.f32 %v220, 2.0
  %v398 = vmul.f32 %v225, 2.0
  %v399 = vmul.f32 %v230, 2.0
  %v400 = vmul.f32 %v235, 2.0
  %v401 = vmul.f32 %v240, 2.0
  %v402 = vmul.f32 %v245, 2.0
  %v403 = vmul.f32 %v250, 2.0
  %v404 = vmul.f32 %v255, 2.0
  %v405 = vmul.f32 %v260, 2.0
  %v406 = vmul.f32 %v265, 2.0
  %v407 = vmul.f32 %v270, 2.0
  %v408 = vsub.f32 %v376, %v392
  %v409 = vsub.f32 %v377, %v393
  %v410 = vsub.f32 %v378, %v394
  %v411 = vsub.f32 %v379, %v395
  %v412 = vsub.f32 %v380, %v396
  %v413 = vsub.f32 %v381, %v397
  %v414 = vsub.f32 %v382, %v398
  %v415 = vsub.f32 %v383, %v399
  %v416 = vsub.f32 %v384, %v400
  %v417 = vsub.f32 %v385, %v401
  %v418 = vsub.f32 %v386, %v402
  %v419 = vsub.f32 %v387, %v403
  %v420 = vsub.f32 %v388, %v404
  %v421 = vsub.f32 %v389, %v405
  %v422 = vsub.f32 %v390, %v406
  %v423 = vsub.f32 %v391, %v407
  %v424 = vmax.f32 %v408, 0.0
  %v425 = vmax.f32 %v409, 0.0
  %v426 = vmax.f32 %v410, 0.0
  %v427 = vmax.f32 %v411, 0.0
  %v428 = vmax.f32 %v412, 0.0
  %v429 = vmax.f32 %v413, 0.0
  %v430 = vmax.f32 %v414, 0.0
  %v431 = vmax.f32 %v415, 0.0
  %v432 = vmax.f32 %v416, 0.0
  %v433 = vmax.f32 %v417, 0.0
  %v434 = vmax.f32 %v418, 0.0
  %v435 = vmax.f32 %v419, 0.0
  %v436 = vmax.f32 %v420, 0.0
  %v437 = vmax.f32 %v421, 0.0
  %v438 = vmax.f32 %v422, 0.0
  %v439 = vmax.f32 %v423, 0.0
  %s440 = smul.u32 0, 128
  %v441 = vlaneseq
  %v442 = vshrl.u32 %v441, 7
  %v443 = vadd.s32 %v442, 8
  %v444 = vadd.s32 %v442, 16
  %v445 = vadd.s32 %v442, 24
  %v446 = vadd.s32 %v442, 32
  %v447 = vadd.s32 %v442, 40
  %v448 = vadd.s32 %v442, 48
  %v449 = vadd.s32 %v442, 56
  %v450 = vadd.s32 %v442, 64
  %v451 = vadd.s32 %v442, 72
  %v452 = vadd.s32 %v442, 80
  %v453 = vadd.s32 %v442, 88
  %v454 = vadd.s32 %v442, 96
  %v455 = vadd.s32 %v442, 104
  %v456 = vadd.s32 %v442, 112
  %v457 = vadd.s32 %v442, 120
  %v458 = vstv %s440
  %v459 = vadd.s32 %v458, %v442
  %v460 = vadd.s32 %v458, %v443
  %v461 = vadd.s32 %v458, %v444
  %v462 = vadd.s32 %v458, %v445
  %v463 = vadd.s32 %v458, %v446
  %v464 = vadd.s32 %v458, %v447
  %v465 = vadd.s32 %v458, %v448
  %v466 = vadd.s32 %v458, %v449
  %v467 = vadd.s32 %v458, %v450
  %v468 = vadd.s32 %v458, %v451
  %v469 = vadd.s32 %v458, %v452
  %v470 = vadd.s32 %v458, %v453
  %v471 = vadd.s32 %v458, %v454
  %v472 = vadd.s32 %v458, %v455
  %v473 = vadd.s32 %v458, %v456
  %v474 = vadd.s32 %v458, %v457
  %s475 = smul.u32 0, 128
  %v476 = vlaneseq
  %v477 = vand.u32 %v476, 127
  %v478 = vstv %s475
  %v479 = vadd.s32 %v478, %v477
  %v480 = vcvt.s32.f32 %v479
  %v481 = vld [vmem:[%s4] sm:$0xff]
  %v482 = vld [vmem:[%s4 + $0x8] sm:$0xff]
  %v483 = vld [vmem:[%s4 + $0x10] sm:$0xff]
  %v484 = vld [vmem:[%s4 + $0x18] sm:$0xff]
  %v485 = vld [vmem:[%s4 + $0x20] sm:$0xff]
  %v486 = vld [vmem:[%s4 + $0x28] sm:$0xff]
  %v487 = vld [vmem:[%s4 + $0x30] sm:$0xff]
  %v488 = vld [vmem:[%s4 + $0x38] sm:$0xff]
  %v489 = vld [vmem:[%s4 + $0x40] sm:$0xff]
  %v490 = vld [vmem:[%s4 + $0x48] sm:$0xff]
  %v491 = vld [vmem:[%s4 + $0x50] sm:$0xff]
  %v492 = vld [vmem:[%s4 + $0x58] sm:$0xff]
  %v493 = vld [vmem:[%s4 + $0x60] sm:$0xff]
  %v494 = vld [vmem:[%s4 + $0x68] sm:$0xff]
  %v495 = vld [vmem:[%s4 + $0x70] sm:$0xff]
  %v496 = vld [vmem:[%s4 + $0x78] sm:$0xff]
  %v497 = vld [vmem:[%s5] sm:$0x1]
  %498 = vset.pattern.permute.xlu0 0
  %499 = vperm.xlu0 %498, %v481
  %v500 = vpop.permute.xlu0 %499
  %501 = vset.pattern.permute.xlu0 0
  %502 = vperm.xlu0 %501, %v482
  %v503 = vpop.permute.xlu0 %502
  %504 = vset.pattern.permute.xlu0 0
  %505 = vperm.xlu0 %504, %v483
  %v506 = vpop.permute.xlu0 %505
  %507 = vset.pattern.permute.xlu0 0
  %508 = vperm.xlu0 %507, %v484
  %v509 = vpop.permute.xlu0 %508
  %510 = vset.pattern.permute.xlu0 0
  %511 = vperm.xlu0 %510, %v485
  %v512 = vpop.permute.xlu0 %511
  %513 = vset.pattern.permute.xlu0 0
  %514 = vperm.xlu0 %513, %v486
  %v515 = vpop.permute.xlu0 %514
  %516 = vset.pattern.permute.xlu0 0
  %517 = vperm.xlu0 %516, %v487
  %v518 = vpop.permute.xlu0 %517
  %519 = vset.pattern.permute.xlu0 0
  %520 = vperm.xlu0 %519, %v488
  %v521 = vpop.permute.xlu0 %520
  %522 = vset.pattern.permute.xlu0 0
  %523 = vperm.xlu0 %522, %v489
  %v524 = vpop.permute.xlu0 %523
  %525 = vset.pattern.permute.xlu0 0
  %526 = vperm.xlu0 %525, %v490
  %v527 = vpop.permute.xlu0 %526
  %528 = vset.pattern.permute.xlu0 0
  %529 = vperm.xlu0 %528, %v491
  %v530 = vpop.permute.xlu0 %529
  %531 = vset.pattern.permute.xlu0 0
  %532 = vperm.xlu0 %531, %v492
  %v533 = vpop.permute.xlu0 %532
  %534 = vset.pattern.permute.xlu0 0
  %535 = vperm.xlu0 %534, %v493
  %v536 = vpop.permute.xlu0 %535
  %537 = vset.pattern.permute.xlu0 0
  %538 = vperm.xlu0 %537, %v494
  %v539 = vpop.permute.xlu0 %538
  %540 = vset.pattern.permute.xlu0 0
  %541 = vperm.xlu0 %540, %v495
  %v542 = vpop.permute.xlu0 %541
  %543 = vset.pattern.permute.xlu0 0
  %544 = vperm.xlu0 %543, %v496
  %v545 = vpop.permute.xlu0 %544
  %v546 = vlaneseq
  %v547 = vshrl.u32 %v546, 7
  %v548 = vsub.s32 0, %v547
  %v549 = vrot.slane %v497, %v548
  %vm550 = vcmp.eq.s32.totalorder %v500, %v549
  %vm551 = vcmp.eq.s32.totalorder %v503, %v549
  %vm552 = vcmp.eq.s32.totalorder %v506, %v549
  %vm553 = vcmp.eq.s32.totalorder %v509, %v549
  %vm554 = vcmp.eq.s32.totalorder %v512, %v549
  %vm555 = vcmp.eq.s32.totalorder %v515, %v549
  %vm556 = vcmp.eq.s32.totalorder %v518, %v549
  %vm557 = vcmp.eq.s32.totalorder %v521, %v549
  %vm558 = vcmp.eq.s32.totalorder %v524, %v549
  %vm559 = vcmp.eq.s32.totalorder %v527, %v549
  %vm560 = vcmp.eq.s32.totalorder %v530, %v549
  %vm561 = vcmp.eq.s32.totalorder %v533, %v549
  %vm562 = vcmp.eq.s32.totalorder %v536, %v549
  %vm563 = vcmp.eq.s32.totalorder %v539, %v549
  %vm564 = vcmp.eq.s32.totalorder %v542, %v549
  %vm565 = vcmp.eq.s32.totalorder %v545, %v549
  %vm566 = vcmp.ne.s32.totalorder %v459, %v479
  %vm567 = vcmp.ne.s32.totalorder %v460, %v479
  %vm568 = vcmp.ne.s32.totalorder %v461, %v479
  %vm569 = vcmp.ne.s32.totalorder %v462, %v479
  %vm570 = vcmp.ne.s32.totalorder %v463, %v479
  %vm571 = vcmp.ne.s32.totalorder %v464, %v479
  %vm572 = vcmp.ne.s32.totalorder %v465, %v479
  %vm573 = vcmp.ne.s32.totalorder %v466, %v479
  %vm574 = vcmp.ne.s32.totalorder %v467, %v479
  %vm575 = vcmp.ne.s32.totalorder %v468, %v479
  %vm576 = vcmp.ne.s32.totalorder %v469, %v479
  %vm577 = vcmp.ne.s32.totalorder %v470, %v479
  %vm578 = vcmp.ne.s32.totalorder %v471, %v479
  %vm579 = vcmp.ne.s32.totalorder %v472, %v479
  %vm580 = vcmp.ne.s32.totalorder %v473, %v479
  %vm581 = vcmp.ne.s32.totalorder %v474, %v479
  %vm582 = vmand %vm550, %vm566
  %vm583 = vmand %vm551, %vm567
  %vm584 = vmand %vm552, %vm568
  %vm585 = vmand %vm553, %vm569
  %vm586 = vmand %vm554, %vm570
  %vm587 = vmand %vm555, %vm571
  %vm588 = vmand %vm556, %vm572
  %vm589 = vmand %vm557, %vm573
  %vm590 = vmand %vm558, %vm574
  %vm591 = vmand %vm559, %vm575
  %vm592 = vmand %vm560, %vm576
  %vm593 = vmand %vm561, %vm577
  %vm594 = vmand %vm562, %vm578
  %vm595 = vmand %vm563, %vm579
  %vm596 = vmand %vm564, %vm580
  %vm597 = vmand %vm565, %vm581
  %v598 = vsel %vm582, %v424, -inf
  %v599 = vsel %vm583, %v425, -inf
  %v600 = vsel %vm584, %v426, -inf
  %v601 = vsel %vm585, %v427, -inf
  %v602 = vsel %vm586, %v428, -inf
  %v603 = vsel %vm587, %v429, -inf
  %v604 = vsel %vm588, %v430, -inf
  %v605 = vsel %vm589, %v431, -inf
  %v606 = vsel %vm590, %v432, -inf
  %v607 = vsel %vm591, %v433, -inf
  %v608 = vsel %vm592, %v434, -inf
  %v609 = vsel %vm593, %v435, -inf
  %v610 = vsel %vm594, %v436, -inf
  %v611 = vsel %vm595, %v437, -inf
  %v612 = vsel %vm596, %v438, -inf
  %v613 = vsel %vm597, %v439, -inf
  %614 = vmax.xlane.f32.xlu0 %v598
  %v615 = vpop.xlane.xlu0 %614
  %616 = vmax.xlane.f32.xlu0 %v599
  %v617 = vpop.xlane.xlu0 %616
  %618 = vmax.xlane.f32.xlu0 %v600
  %v619 = vpop.xlane.xlu0 %618
  %620 = vmax.xlane.f32.xlu0 %v601
  %v621 = vpop.xlane.xlu0 %620
  %622 = vmax.xlane.f32.xlu0 %v602
  %v623 = vpop.xlane.xlu0 %622
  %624 = vmax.xlane.f32.xlu0 %v603
  %v625 = vpop.xlane.xlu0 %624
  %626 = vmax.xlane.f32.xlu0 %v604
  %v627 = vpop.xlane.xlu0 %626
  %628 = vmax.xlane.f32.xlu0 %v605
  %v629 = vpop.xlane.xlu0 %628
  %630 = vmax.xlane.f32.xlu0 %v606
  %v631 = vpop.xlane.xlu0 %630
  %632 = vmax.xlane.f32.xlu0 %v607
  %v633 = vpop.xlane.xlu0 %632
  %634 = vmax.xlane.f32.xlu0 %v608
  %v635 = vpop.xlane.xlu0 %634
  %636 = vmax.xlane.f32.xlu0 %v609
  %v637 = vpop.xlane.xlu0 %636
  %638 = vmax.xlane.f32.xlu0 %v610
  %v639 = vpop.xlane.xlu0 %638
  %640 = vmax.xlane.f32.xlu0 %v611
  %v641 = vpop.xlane.xlu0 %640
  %642 = vmax.xlane.f32.xlu0 %v612
  %v643 = vpop.xlane.xlu0 %642
  %644 = vmax.xlane.f32.xlu0 %v613
  %v645 = vpop.xlane.xlu0 %644
  %vm646 = vcmp.eq.f32.partialorder %v598, %v615
  %vm647 = vcmp.eq.f32.partialorder %v599, %v617
  %vm648 = vcmp.eq.f32.partialorder %v600, %v619
  %vm649 = vcmp.eq.f32.partialorder %v601, %v621
  %vm650 = vcmp.eq.f32.partialorder %v602, %v623
  %vm651 = vcmp.eq.f32.partialorder %v603, %v625
  %vm652 = vcmp.eq.f32.partialorder %v604, %v627
  %vm653 = vcmp.eq.f32.partialorder %v605, %v629
  %vm654 = vcmp.eq.f32.partialorder %v606, %v631
  %vm655 = vcmp.eq.f32.partialorder %v607, %v633
  %vm656 = vcmp.eq.f32.partialorder %v608, %v635
  %vm657 = vcmp.eq.f32.partialorder %v609, %v637
  %vm658 = vcmp.eq.f32.partialorder %v610, %v639
  %vm659 = vcmp.eq.f32.partialorder %v611, %v641
  %vm660 = vcmp.eq.f32.partialorder %v612, %v643
  %vm661 = vcmp.eq.f32.partialorder %v613, %v645
  %v662 = vsel %vm646, %v480, 1e+09
  %v663 = vsel %vm647, %v480, 1e+09
  %v664 = vsel %vm648, %v480, 1e+09
  %v665 = vsel %vm649, %v480, 1e+09
  %v666 = vsel %vm650, %v480, 1e+09
  %v667 = vsel %vm651, %v480, 1e+09
  %v668 = vsel %vm652, %v480, 1e+09
  %v669 = vsel %vm653, %v480, 1e+09
  %v670 = vsel %vm654, %v480, 1e+09
  %v671 = vsel %vm655, %v480, 1e+09
  %v672 = vsel %vm656, %v480, 1e+09
  %v673 = vsel %vm657, %v480, 1e+09
  %v674 = vsel %vm658, %v480, 1e+09
  %v675 = vsel %vm659, %v480, 1e+09
  %v676 = vsel %vm660, %v480, 1e+09
  %v677 = vsel %vm661, %v480, 1e+09
  %678 = vmin.xlane.f32.xlu0 %v662
  %v679 = vpop.xlane.xlu0 %678
  %680 = vmin.xlane.f32.xlu0 %v663
  %v681 = vpop.xlane.xlu0 %680
  %682 = vmin.xlane.f32.xlu0 %v664
  %v683 = vpop.xlane.xlu0 %682
  %684 = vmin.xlane.f32.xlu0 %v665
  %v685 = vpop.xlane.xlu0 %684
  %686 = vmin.xlane.f32.xlu0 %v666
  %v687 = vpop.xlane.xlu0 %686
  %688 = vmin.xlane.f32.xlu0 %v667
  %v689 = vpop.xlane.xlu0 %688
  %690 = vmin.xlane.f32.xlu0 %v668
  %v691 = vpop.xlane.xlu0 %690
  %692 = vmin.xlane.f32.xlu0 %v669
  %v693 = vpop.xlane.xlu0 %692
  %694 = vmin.xlane.f32.xlu0 %v670
  %v695 = vpop.xlane.xlu0 %694
  %696 = vmin.xlane.f32.xlu0 %v671
  %v697 = vpop.xlane.xlu0 %696
  %698 = vmin.xlane.f32.xlu0 %v672
  %v699 = vpop.xlane.xlu0 %698
  %700 = vmin.xlane.f32.xlu0 %v673
  %v701 = vpop.xlane.xlu0 %700
  %702 = vmin.xlane.f32.xlu0 %v674
  %v703 = vpop.xlane.xlu0 %702
  %704 = vmin.xlane.f32.xlu0 %v675
  %v705 = vpop.xlane.xlu0 %704
  %706 = vmin.xlane.f32.xlu0 %v676
  %v707 = vpop.xlane.xlu0 %706
  %708 = vmin.xlane.f32.xlu0 %v677
  %v709 = vpop.xlane.xlu0 %708
  %v710 = vld [vmem:[%s6] sm:$0xff]
  %v711 = vld [vmem:[%s6 + $0x8] sm:$0xff]
  %v712 = vld [vmem:[%s6 + $0x10] sm:$0xff]
  %v713 = vld [vmem:[%s6 + $0x18] sm:$0xff]
  %v714 = vld [vmem:[%s6 + $0x20] sm:$0xff]
  %v715 = vld [vmem:[%s6 + $0x28] sm:$0xff]
  %v716 = vld [vmem:[%s6 + $0x30] sm:$0xff]
  %v717 = vld [vmem:[%s6 + $0x38] sm:$0xff]
  %v718 = vld [vmem:[%s6 + $0x40] sm:$0xff]
  %v719 = vld [vmem:[%s6 + $0x48] sm:$0xff]
  %v720 = vld [vmem:[%s6 + $0x50] sm:$0xff]
  %v721 = vld [vmem:[%s6 + $0x58] sm:$0xff]
  %v722 = vld [vmem:[%s6 + $0x60] sm:$0xff]
  %v723 = vld [vmem:[%s6 + $0x68] sm:$0xff]
  %v724 = vld [vmem:[%s6 + $0x70] sm:$0xff]
  %v725 = vld [vmem:[%s6 + $0x78] sm:$0xff]
  %vm726 = vcmp.gt.f32.partialorder %v615, %v710
  %vm727 = vcmp.gt.f32.partialorder %v617, %v711
  %vm728 = vcmp.gt.f32.partialorder %v619, %v712
  %vm729 = vcmp.gt.f32.partialorder %v621, %v713
  %vm730 = vcmp.gt.f32.partialorder %v623, %v714
  %vm731 = vcmp.gt.f32.partialorder %v625, %v715
  %vm732 = vcmp.gt.f32.partialorder %v627, %v716
  %vm733 = vcmp.gt.f32.partialorder %v629, %v717
  %vm734 = vcmp.gt.f32.partialorder %v631, %v718
  %vm735 = vcmp.gt.f32.partialorder %v633, %v719
  %vm736 = vcmp.gt.f32.partialorder %v635, %v720
  %vm737 = vcmp.gt.f32.partialorder %v637, %v721
  %vm738 = vcmp.gt.f32.partialorder %v639, %v722
  %vm739 = vcmp.gt.f32.partialorder %v641, %v723
  %vm740 = vcmp.gt.f32.partialorder %v643, %v724
  %vm741 = vcmp.gt.f32.partialorder %v645, %v725
  %v742 = vcvt.f32.s32.to.zero.pseudo %v679
  %v743 = vcvt.f32.s32.to.zero.pseudo %v681
  %v744 = vcvt.f32.s32.to.zero.pseudo %v683
  %v745 = vcvt.f32.s32.to.zero.pseudo %v685
  %v746 = vcvt.f32.s32.to.zero.pseudo %v687
  %v747 = vcvt.f32.s32.to.zero.pseudo %v689
  %v748 = vcvt.f32.s32.to.zero.pseudo %v691
  %v749 = vcvt.f32.s32.to.zero.pseudo %v693
  %v750 = vcvt.f32.s32.to.zero.pseudo %v695
  %v751 = vcvt.f32.s32.to.zero.pseudo %v697
  %v752 = vcvt.f32.s32.to.zero.pseudo %v699
  %v753 = vcvt.f32.s32.to.zero.pseudo %v701
  %v754 = vcvt.f32.s32.to.zero.pseudo %v703
  %v755 = vcvt.f32.s32.to.zero.pseudo %v705
  %v756 = vcvt.f32.s32.to.zero.pseudo %v707
  %v757 = vcvt.f32.s32.to.zero.pseudo %v709
  %v758 = vld [vmem:[%s8] sm:$0xff]
  %v759 = vld [vmem:[%s8 + $0x8] sm:$0xff]
  %v760 = vld [vmem:[%s8 + $0x10] sm:$0xff]
  %v761 = vld [vmem:[%s8 + $0x18] sm:$0xff]
  %v762 = vld [vmem:[%s8 + $0x20] sm:$0xff]
  %v763 = vld [vmem:[%s8 + $0x28] sm:$0xff]
  %v764 = vld [vmem:[%s8 + $0x30] sm:$0xff]
  %v765 = vld [vmem:[%s8 + $0x38] sm:$0xff]
  %v766 = vld [vmem:[%s8 + $0x40] sm:$0xff]
  %v767 = vld [vmem:[%s8 + $0x48] sm:$0xff]
  %v768 = vld [vmem:[%s8 + $0x50] sm:$0xff]
  %v769 = vld [vmem:[%s8 + $0x58] sm:$0xff]
  %v770 = vld [vmem:[%s8 + $0x60] sm:$0xff]
  %v771 = vld [vmem:[%s8 + $0x68] sm:$0xff]
  %v772 = vld [vmem:[%s8 + $0x70] sm:$0xff]
  %v773 = vld [vmem:[%s8 + $0x78] sm:$0xff]
  %v774 = vsel %vm726, %v742, %v758
  %v775 = vsel %vm727, %v743, %v759
  %v776 = vsel %vm728, %v744, %v760
  %v777 = vsel %vm729, %v745, %v761
  %v778 = vsel %vm730, %v746, %v762
  %v779 = vsel %vm731, %v747, %v763
  %v780 = vsel %vm732, %v748, %v764
  %v781 = vsel %vm733, %v749, %v765
  %v782 = vsel %vm734, %v750, %v766
  %v783 = vsel %vm735, %v751, %v767
  %v784 = vsel %vm736, %v752, %v768
  %v785 = vsel %vm737, %v753, %v769
  %v786 = vsel %vm738, %v754, %v770
  %v787 = vsel %vm739, %v755, %v771
  %v788 = vsel %vm740, %v756, %v772
  %v789 = vsel %vm741, %v757, %v773
  %vm790 = vcmask 7168
  %791 = vst.msk [vmem:[%s8] sm:$0xff] %vm790, %v774
  %792 = vst.msk [vmem:[%s8 + $0x8] sm:$0xff] %vm790, %v775
  %793 = vst.msk [vmem:[%s8 + $0x10] sm:$0xff] %vm790, %v776
  %794 = vst.msk [vmem:[%s8 + $0x18] sm:$0xff] %vm790, %v777
  %795 = vst.msk [vmem:[%s8 + $0x20] sm:$0xff] %vm790, %v778
  %796 = vst.msk [vmem:[%s8 + $0x28] sm:$0xff] %vm790, %v779
  %797 = vst.msk [vmem:[%s8 + $0x30] sm:$0xff] %vm790, %v780
  %798 = vst.msk [vmem:[%s8 + $0x38] sm:$0xff] %vm790, %v781
  %799 = vst.msk [vmem:[%s8 + $0x40] sm:$0xff] %vm790, %v782
  %800 = vst.msk [vmem:[%s8 + $0x48] sm:$0xff] %vm790, %v783
  %801 = vst.msk [vmem:[%s8 + $0x50] sm:$0xff] %vm790, %v784
  %802 = vst.msk [vmem:[%s8 + $0x58] sm:$0xff] %vm790, %v785
  %803 = vst.msk [vmem:[%s8 + $0x60] sm:$0xff] %vm790, %v786
  %804 = vst.msk [vmem:[%s8 + $0x68] sm:$0xff] %vm790, %v787
  %805 = vst.msk [vmem:[%s8 + $0x70] sm:$0xff] %vm790, %v788
  %806 = vst.msk [vmem:[%s8 + $0x78] sm:$0xff] %vm790, %v789
  %v807 = vld [vmem:[%s6] sm:$0xff]
  %v808 = vld [vmem:[%s6 + $0x8] sm:$0xff]
  %v809 = vld [vmem:[%s6 + $0x10] sm:$0xff]
  %v810 = vld [vmem:[%s6 + $0x18] sm:$0xff]
  %v811 = vld [vmem:[%s6 + $0x20] sm:$0xff]
  %v812 = vld [vmem:[%s6 + $0x28] sm:$0xff]
  %v813 = vld [vmem:[%s6 + $0x30] sm:$0xff]
  %v814 = vld [vmem:[%s6 + $0x38] sm:$0xff]
  %v815 = vld [vmem:[%s6 + $0x40] sm:$0xff]
  %v816 = vld [vmem:[%s6 + $0x48] sm:$0xff]
  %v817 = vld [vmem:[%s6 + $0x50] sm:$0xff]
  %v818 = vld [vmem:[%s6 + $0x58] sm:$0xff]
  %v819 = vld [vmem:[%s6 + $0x60] sm:$0xff]
  %v820 = vld [vmem:[%s6 + $0x68] sm:$0xff]
  %v821 = vld [vmem:[%s6 + $0x70] sm:$0xff]
  %v822 = vld [vmem:[%s6 + $0x78] sm:$0xff]
  %v823 = vsel %vm726, %v615, %v807
  %v824 = vsel %vm727, %v617, %v808
  %v825 = vsel %vm728, %v619, %v809
  %v826 = vsel %vm729, %v621, %v810
  %v827 = vsel %vm730, %v623, %v811
  %v828 = vsel %vm731, %v625, %v812
  %v829 = vsel %vm732, %v627, %v813
  %v830 = vsel %vm733, %v629, %v814
  %v831 = vsel %vm734, %v631, %v815
  %v832 = vsel %vm735, %v633, %v816
  %v833 = vsel %vm736, %v635, %v817
  %v834 = vsel %vm737, %v637, %v818
  %v835 = vsel %vm738, %v639, %v819
  %v836 = vsel %vm739, %v641, %v820
  %v837 = vsel %vm740, %v643, %v821
  %v838 = vsel %vm741, %v645, %v822
  %839 = vst.msk [vmem:[%s6] sm:$0xff] %vm790, %v823
  %840 = vst.msk [vmem:[%s6 + $0x8] sm:$0xff] %vm790, %v824
  %841 = vst.msk [vmem:[%s6 + $0x10] sm:$0xff] %vm790, %v825
  %842 = vst.msk [vmem:[%s6 + $0x18] sm:$0xff] %vm790, %v826
  %843 = vst.msk [vmem:[%s6 + $0x20] sm:$0xff] %vm790, %v827
  %844 = vst.msk [vmem:[%s6 + $0x28] sm:$0xff] %vm790, %v828
  %845 = vst.msk [vmem:[%s6 + $0x30] sm:$0xff] %vm790, %v829
  %846 = vst.msk [vmem:[%s6 + $0x38] sm:$0xff] %vm790, %v830
  %847 = vst.msk [vmem:[%s6 + $0x40] sm:$0xff] %vm790, %v831
  %848 = vst.msk [vmem:[%s6 + $0x48] sm:$0xff] %vm790, %v832
  %849 = vst.msk [vmem:[%s6 + $0x50] sm:$0xff] %vm790, %v833
  %850 = vst.msk [vmem:[%s6 + $0x58] sm:$0xff] %vm790, %v834
  %851 = vst.msk [vmem:[%s6 + $0x60] sm:$0xff] %vm790, %v835
  %852 = vst.msk [vmem:[%s6 + $0x68] sm:$0xff] %vm790, %v836
  %853 = vst.msk [vmem:[%s6 + $0x70] sm:$0xff] %vm790, %v837
  %854 = vst.msk [vmem:[%s6 + $0x78] sm:$0xff] %vm790, %v838
  %v855 = vsel %vm550, inf, %v424
  %v856 = vsel %vm551, inf, %v425
  %v857 = vsel %vm552, inf, %v426
  %v858 = vsel %vm553, inf, %v427
  %v859 = vsel %vm554, inf, %v428
  %v860 = vsel %vm555, inf, %v429
  %v861 = vsel %vm556, inf, %v430
  %v862 = vsel %vm557, inf, %v431
  %v863 = vsel %vm558, inf, %v432
  %v864 = vsel %vm559, inf, %v433
  %v865 = vsel %vm560, inf, %v434
  %v866 = vsel %vm561, inf, %v435
  %v867 = vsel %vm562, inf, %v436
  %v868 = vsel %vm563, inf, %v437
  %v869 = vsel %vm564, inf, %v438
  %v870 = vsel %vm565, inf, %v439
  %871 = vmin.xlane.f32.xlu0 %v855
  %v872 = vpop.xlane.xlu0 %871
  %873 = vmin.xlane.f32.xlu0 %v856
  %v874 = vpop.xlane.xlu0 %873
  %875 = vmin.xlane.f32.xlu0 %v857
  %v876 = vpop.xlane.xlu0 %875
  %877 = vmin.xlane.f32.xlu0 %v858
  %v878 = vpop.xlane.xlu0 %877
  %879 = vmin.xlane.f32.xlu0 %v859
  %v880 = vpop.xlane.xlu0 %879
  %881 = vmin.xlane.f32.xlu0 %v860
  %v882 = vpop.xlane.xlu0 %881
  %883 = vmin.xlane.f32.xlu0 %v861
  %v884 = vpop.xlane.xlu0 %883
  %885 = vmin.xlane.f32.xlu0 %v862
  %v886 = vpop.xlane.xlu0 %885
  %887 = vmin.xlane.f32.xlu0 %v863
  %v888 = vpop.xlane.xlu0 %887
  %889 = vmin.xlane.f32.xlu0 %v864
  %v890 = vpop.xlane.xlu0 %889
  %891 = vmin.xlane.f32.xlu0 %v865
  %v892 = vpop.xlane.xlu0 %891
  %893 = vmin.xlane.f32.xlu0 %v866
  %v894 = vpop.xlane.xlu0 %893
  %895 = vmin.xlane.f32.xlu0 %v867
  %v896 = vpop.xlane.xlu0 %895
  %897 = vmin.xlane.f32.xlu0 %v868
  %v898 = vpop.xlane.xlu0 %897
  %899 = vmin.xlane.f32.xlu0 %v869
  %v900 = vpop.xlane.xlu0 %899
  %901 = vmin.xlane.f32.xlu0 %v870
  %v902 = vpop.xlane.xlu0 %901
  %vm903 = vcmp.eq.f32.partialorder %v855, %v872
  %vm904 = vcmp.eq.f32.partialorder %v856, %v874
  %vm905 = vcmp.eq.f32.partialorder %v857, %v876
  %vm906 = vcmp.eq.f32.partialorder %v858, %v878
  %vm907 = vcmp.eq.f32.partialorder %v859, %v880
  %vm908 = vcmp.eq.f32.partialorder %v860, %v882
  %vm909 = vcmp.eq.f32.partialorder %v861, %v884
  %vm910 = vcmp.eq.f32.partialorder %v862, %v886
  %vm911 = vcmp.eq.f32.partialorder %v863, %v888
  %vm912 = vcmp.eq.f32.partialorder %v864, %v890
  %vm913 = vcmp.eq.f32.partialorder %v865, %v892
  %vm914 = vcmp.eq.f32.partialorder %v866, %v894
  %vm915 = vcmp.eq.f32.partialorder %v867, %v896
  %vm916 = vcmp.eq.f32.partialorder %v868, %v898
  %vm917 = vcmp.eq.f32.partialorder %v869, %v900
  %vm918 = vcmp.eq.f32.partialorder %v870, %v902
  %v919 = vsel %vm903, %v480, 1e+09
  %v920 = vsel %vm904, %v480, 1e+09
  %v921 = vsel %vm905, %v480, 1e+09
  %v922 = vsel %vm906, %v480, 1e+09
  %v923 = vsel %vm907, %v480, 1e+09
  %v924 = vsel %vm908, %v480, 1e+09
  %v925 = vsel %vm909, %v480, 1e+09
  %v926 = vsel %vm910, %v480, 1e+09
  %v927 = vsel %vm911, %v480, 1e+09
  %v928 = vsel %vm912, %v480, 1e+09
  %v929 = vsel %vm913, %v480, 1e+09
  %v930 = vsel %vm914, %v480, 1e+09
  %v931 = vsel %vm915, %v480, 1e+09
  %v932 = vsel %vm916, %v480, 1e+09
  %v933 = vsel %vm917, %v480, 1e+09
  %v934 = vsel %vm918, %v480, 1e+09
  %935 = vmin.xlane.f32.xlu0 %v919
  %v936 = vpop.xlane.xlu0 %935
  %937 = vmin.xlane.f32.xlu0 %v920
  %v938 = vpop.xlane.xlu0 %937
  %939 = vmin.xlane.f32.xlu0 %v921
  %v940 = vpop.xlane.xlu0 %939
  %941 = vmin.xlane.f32.xlu0 %v922
  %v942 = vpop.xlane.xlu0 %941
  %943 = vmin.xlane.f32.xlu0 %v923
  %v944 = vpop.xlane.xlu0 %943
  %945 = vmin.xlane.f32.xlu0 %v924
  %v946 = vpop.xlane.xlu0 %945
  %947 = vmin.xlane.f32.xlu0 %v925
  %v948 = vpop.xlane.xlu0 %947
  %949 = vmin.xlane.f32.xlu0 %v926
  %v950 = vpop.xlane.xlu0 %949
  %951 = vmin.xlane.f32.xlu0 %v927
  %v952 = vpop.xlane.xlu0 %951
  %953 = vmin.xlane.f32.xlu0 %v928
  %v954 = vpop.xlane.xlu0 %953
  %955 = vmin.xlane.f32.xlu0 %v929
  %v956 = vpop.xlane.xlu0 %955
  %957 = vmin.xlane.f32.xlu0 %v930
  %v958 = vpop.xlane.xlu0 %957
  %959 = vmin.xlane.f32.xlu0 %v931
  %v960 = vpop.xlane.xlu0 %959
  %961 = vmin.xlane.f32.xlu0 %v932
  %v962 = vpop.xlane.xlu0 %961
  %963 = vmin.xlane.f32.xlu0 %v933
  %v964 = vpop.xlane.xlu0 %963
  %965 = vmin.xlane.f32.xlu0 %v934
  %v966 = vpop.xlane.xlu0 %965
  %v967 = vld [vmem:[%s7] sm:$0xff]
  %v968 = vld [vmem:[%s7 + $0x8] sm:$0xff]
  %v969 = vld [vmem:[%s7 + $0x10] sm:$0xff]
  %v970 = vld [vmem:[%s7 + $0x18] sm:$0xff]
  %v971 = vld [vmem:[%s7 + $0x20] sm:$0xff]
  %v972 = vld [vmem:[%s7 + $0x28] sm:$0xff]
  %v973 = vld [vmem:[%s7 + $0x30] sm:$0xff]
  %v974 = vld [vmem:[%s7 + $0x38] sm:$0xff]
  %v975 = vld [vmem:[%s7 + $0x40] sm:$0xff]
  %v976 = vld [vmem:[%s7 + $0x48] sm:$0xff]
  %v977 = vld [vmem:[%s7 + $0x50] sm:$0xff]
  %v978 = vld [vmem:[%s7 + $0x58] sm:$0xff]
  %v979 = vld [vmem:[%s7 + $0x60] sm:$0xff]
  %v980 = vld [vmem:[%s7 + $0x68] sm:$0xff]
  %v981 = vld [vmem:[%s7 + $0x70] sm:$0xff]
  %v982 = vld [vmem:[%s7 + $0x78] sm:$0xff]
  %vm983 = vcmp.lt.f32.partialorder %v872, %v967
  %vm984 = vcmp.lt.f32.partialorder %v874, %v968
  %vm985 = vcmp.lt.f32.partialorder %v876, %v969
  %vm986 = vcmp.lt.f32.partialorder %v878, %v970
  %vm987 = vcmp.lt.f32.partialorder %v880, %v971
  %vm988 = vcmp.lt.f32.partialorder %v882, %v972
  %vm989 = vcmp.lt.f32.partialorder %v884, %v973
  %vm990 = vcmp.lt.f32.partialorder %v886, %v974
  %vm991 = vcmp.lt.f32.partialorder %v888, %v975
  %vm992 = vcmp.lt.f32.partialorder %v890, %v976
  %vm993 = vcmp.lt.f32.partialorder %v892, %v977
  %vm994 = vcmp.lt.f32.partialorder %v894, %v978
  %vm995 = vcmp.lt.f32.partialorder %v896, %v979
  %vm996 = vcmp.lt.f32.partialorder %v898, %v980
  %vm997 = vcmp.lt.f32.partialorder %v900, %v981
  %vm998 = vcmp.lt.f32.partialorder %v902, %v982
  %v999 = vcvt.f32.s32.to.zero.pseudo %v936
  %v1000 = vcvt.f32.s32.to.zero.pseudo %v938
  %v1001 = vcvt.f32.s32.to.zero.pseudo %v940
  %v1002 = vcvt.f32.s32.to.zero.pseudo %v942
  %v1003 = vcvt.f32.s32.to.zero.pseudo %v944
  %v1004 = vcvt.f32.s32.to.zero.pseudo %v946
  %v1005 = vcvt.f32.s32.to.zero.pseudo %v948
  %v1006 = vcvt.f32.s32.to.zero.pseudo %v950
  %v1007 = vcvt.f32.s32.to.zero.pseudo %v952
  %v1008 = vcvt.f32.s32.to.zero.pseudo %v954
  %v1009 = vcvt.f32.s32.to.zero.pseudo %v956
  %v1010 = vcvt.f32.s32.to.zero.pseudo %v958
  %v1011 = vcvt.f32.s32.to.zero.pseudo %v960
  %v1012 = vcvt.f32.s32.to.zero.pseudo %v962
  %v1013 = vcvt.f32.s32.to.zero.pseudo %v964
  %v1014 = vcvt.f32.s32.to.zero.pseudo %v966
  %v1015 = vld [vmem:[%s9] sm:$0xff]
  %v1016 = vld [vmem:[%s9 + $0x8] sm:$0xff]
  %v1017 = vld [vmem:[%s9 + $0x10] sm:$0xff]
  %v1018 = vld [vmem:[%s9 + $0x18] sm:$0xff]
  %v1019 = vld [vmem:[%s9 + $0x20] sm:$0xff]
  %v1020 = vld [vmem:[%s9 + $0x28] sm:$0xff]
  %v1021 = vld [vmem:[%s9 + $0x30] sm:$0xff]
  %v1022 = vld [vmem:[%s9 + $0x38] sm:$0xff]
  %v1023 = vld [vmem:[%s9 + $0x40] sm:$0xff]
  %v1024 = vld [vmem:[%s9 + $0x48] sm:$0xff]
  %v1025 = vld [vmem:[%s9 + $0x50] sm:$0xff]
  %v1026 = vld [vmem:[%s9 + $0x58] sm:$0xff]
  %v1027 = vld [vmem:[%s9 + $0x60] sm:$0xff]
  %v1028 = vld [vmem:[%s9 + $0x68] sm:$0xff]
  %v1029 = vld [vmem:[%s9 + $0x70] sm:$0xff]
  %v1030 = vld [vmem:[%s9 + $0x78] sm:$0xff]
  %v1031 = vsel %vm983, %v999, %v1015
  %v1032 = vsel %vm984, %v1000, %v1016
  %v1033 = vsel %vm985, %v1001, %v1017
  %v1034 = vsel %vm986, %v1002, %v1018
  %v1035 = vsel %vm987, %v1003, %v1019
  %v1036 = vsel %vm988, %v1004, %v1020
  %v1037 = vsel %vm989, %v1005, %v1021
  %v1038 = vsel %vm990, %v1006, %v1022
  %v1039 = vsel %vm991, %v1007, %v1023
  %v1040 = vsel %vm992, %v1008, %v1024
  %v1041 = vsel %vm993, %v1009, %v1025
  %v1042 = vsel %vm994, %v1010, %v1026
  %v1043 = vsel %vm995, %v1011, %v1027
  %v1044 = vsel %vm996, %v1012, %v1028
  %v1045 = vsel %vm997, %v1013, %v1029
  %v1046 = vsel %vm998, %v1014, %v1030
  %1047 = vst.msk [vmem:[%s9] sm:$0xff] %vm790, %v1031
  %1048 = vst.msk [vmem:[%s9 + $0x8] sm:$0xff] %vm790, %v1032
  %1049 = vst.msk [vmem:[%s9 + $0x10] sm:$0xff] %vm790, %v1033
  %1050 = vst.msk [vmem:[%s9 + $0x18] sm:$0xff] %vm790, %v1034
  %1051 = vst.msk [vmem:[%s9 + $0x20] sm:$0xff] %vm790, %v1035
  %1052 = vst.msk [vmem:[%s9 + $0x28] sm:$0xff] %vm790, %v1036
  %1053 = vst.msk [vmem:[%s9 + $0x30] sm:$0xff] %vm790, %v1037
  %1054 = vst.msk [vmem:[%s9 + $0x38] sm:$0xff] %vm790, %v1038
  %1055 = vst.msk [vmem:[%s9 + $0x40] sm:$0xff] %vm790, %v1039
  %1056 = vst.msk [vmem:[%s9 + $0x48] sm:$0xff] %vm790, %v1040
  %1057 = vst.msk [vmem:[%s9 + $0x50] sm:$0xff] %vm790, %v1041
  %1058 = vst.msk [vmem:[%s9 + $0x58] sm:$0xff] %vm790, %v1042
  %1059 = vst.msk [vmem:[%s9 + $0x60] sm:$0xff] %vm790, %v1043
  %1060 = vst.msk [vmem:[%s9 + $0x68] sm:$0xff] %vm790, %v1044
  %1061 = vst.msk [vmem:[%s9 + $0x70] sm:$0xff] %vm790, %v1045
  %1062 = vst.msk [vmem:[%s9 + $0x78] sm:$0xff] %vm790, %v1046
  %v1063 = vld [vmem:[%s7] sm:$0xff]
  %v1064 = vld [vmem:[%s7 + $0x8] sm:$0xff]
  %v1065 = vld [vmem:[%s7 + $0x10] sm:$0xff]
  %v1066 = vld [vmem:[%s7 + $0x18] sm:$0xff]
  %v1067 = vld [vmem:[%s7 + $0x20] sm:$0xff]
  %v1068 = vld [vmem:[%s7 + $0x28] sm:$0xff]
  %v1069 = vld [vmem:[%s7 + $0x30] sm:$0xff]
  %v1070 = vld [vmem:[%s7 + $0x38] sm:$0xff]
  %v1071 = vld [vmem:[%s7 + $0x40] sm:$0xff]
  %v1072 = vld [vmem:[%s7 + $0x48] sm:$0xff]
  %v1073 = vld [vmem:[%s7 + $0x50] sm:$0xff]
  %v1074 = vld [vmem:[%s7 + $0x58] sm:$0xff]
  %v1075 = vld [vmem:[%s7 + $0x60] sm:$0xff]
  %v1076 = vld [vmem:[%s7 + $0x68] sm:$0xff]
  %v1077 = vld [vmem:[%s7 + $0x70] sm:$0xff]
  %v1078 = vld [vmem:[%s7 + $0x78] sm:$0xff]
  %v1079 = vsel %vm983, %v872, %v1063
  %v1080 = vsel %vm984, %v874, %v1064
  %v1081 = vsel %vm985, %v876, %v1065
  %v1082 = vsel %vm986, %v878, %v1066
  %v1083 = vsel %vm987, %v880, %v1067
  %v1084 = vsel %vm988, %v882, %v1068
  %v1085 = vsel %vm989, %v884, %v1069
  %v1086 = vsel %vm990, %v886, %v1070
  %v1087 = vsel %vm991, %v888, %v1071
  %v1088 = vsel %vm992, %v890, %v1072
  %v1089 = vsel %vm993, %v892, %v1073
  %v1090 = vsel %vm994, %v894, %v1074
  %v1091 = vsel %vm995, %v896, %v1075
  %v1092 = vsel %vm996, %v898, %v1076
  %v1093 = vsel %vm997, %v900, %v1077
  %v1094 = vsel %vm998, %v902, %v1078
  %1095 = vst.msk [vmem:[%s7] sm:$0xff] %vm790, %v1079
  %1096 = vst.msk [vmem:[%s7 + $0x8] sm:$0xff] %vm790, %v1080
  %1097 = vst.msk [vmem:[%s7 + $0x10] sm:$0xff] %vm790, %v1081
  %1098 = vst.msk [vmem:[%s7 + $0x18] sm:$0xff] %vm790, %v1082
  %1099 = vst.msk [vmem:[%s7 + $0x20] sm:$0xff] %vm790, %v1083
  %1100 = vst.msk [vmem:[%s7 + $0x28] sm:$0xff] %vm790, %v1084
  %1101 = vst.msk [vmem:[%s7 + $0x30] sm:$0xff] %vm790, %v1085
  %1102 = vst.msk [vmem:[%s7 + $0x38] sm:$0xff] %vm790, %v1086
  %1103 = vst.msk [vmem:[%s7 + $0x40] sm:$0xff] %vm790, %v1087
  %1104 = vst.msk [vmem:[%s7 + $0x48] sm:$0xff] %vm790, %v1088
  %1105 = vst.msk [vmem:[%s7 + $0x50] sm:$0xff] %vm790, %v1089
  %1106 = vst.msk [vmem:[%s7 + $0x58] sm:$0xff] %vm790, %v1090
  %1107 = vst.msk [vmem:[%s7 + $0x60] sm:$0xff] %vm790, %v1091
  %1108 = vst.msk [vmem:[%s7 + $0x68] sm:$0xff] %vm790, %v1092
  %1109 = vst.msk [vmem:[%s7 + $0x70] sm:$0xff] %vm790, %v1093
  %1110 = vst.msk [vmem:[%s7 + $0x78] sm:$0xff] %vm790, %v1094
  // Predicated region
  $region30: #{tpu_custom_call.1} parent=0 // pred_check
    _
  $region31: #{tpu_custom_call.1} parent=0 // pred_check_branch
    %1112 = sbr.rel (0) target = $region33
  $region32: #{tpu_custom_call.1} parent=0 // pred_region
    _
  $region33: #{tpu_custom_call.1} parent=0 // pred_fallthru
    _
  // Predicated region
  $region34: #{tpu_custom_call.1} parent=0 // pred_check
    _
  $region35: #{tpu_custom_call.1} parent=0 // pred_check_branch
    %1114 = sbr.rel (0) target = $region37
  $region36: #{tpu_custom_call.1} parent=0 // pred_region
    _
  $region37: #{tpu_custom_call.1} parent=0 // pred_fallthru
    _
  // Predicated region
  $region38: #{tpu_custom_call.1} parent=0 // pred_check
    _
  $region39: #{tpu_custom_call.1} parent=0 // pred_check_branch
    %1116 = sbr.rel (0) target = $region41
  $region40: #{tpu_custom_call.1} parent=0 // pred_region
    _
  $region41: #{tpu_custom_call.1} parent=0 // pred_fallthru
    _
  // Predicated region
  $region42: #{tpu_custom_call.1} parent=0 // pred_check
    _
  $region43: #{tpu_custom_call.1} parent=0 // pred_check_branch
    %1118 = sbr.rel (0) target = $region45
  $region44: #{tpu_custom_call.1} parent=0 // pred_region
    _
  $region45: #{tpu_custom_call.1} parent=0 // pred_fallthru
    _
  // Predicated region
  $region46: #{tpu_custom_call.1} parent=0 // pred_check
    _
  $region47: #{tpu_custom_call.1} parent=0 // pred_check_branch
    %1120 = sbr.rel (0) target = $region49
  $region48: #{tpu_custom_call.1} parent=0 // pred_region
    _
  $region49: #{tpu_custom_call.1} parent=0 // pred_fallthru
    _
  // Predicated region
  $region50: #{tpu_custom_call.1} parent=0 // pred_check
    _
  $region51: #{tpu_custom_call.1} parent=0 // pred_check_branch
    %1122 = sbr.rel (0) target = $region53
  $region52: #{tpu_custom_call.1} parent=0 // pred_region
    _
  $region53: #{tpu_custom_call.1} parent=0 // pred_fallthru
    _
  // Predicated region
  $region54: #{tpu_custom_call.1} parent=0 // pred_check
    _
  $region55: #{tpu_custom_call.1} parent=0 // pred_check_branch
    %1124 = sbr.rel (0) target = $region57
  $region56: #{tpu_custom_call.1} parent=0 // pred_region
    _
  $region57: #{tpu_custom_call.1} parent=0 // pred_fallthru
    _
  // Predicated region
  $region58: #{tpu_custom_call.1} parent=0 // pred_check
    _
  $region59: #{tpu_custom_call.1} parent=0 // pred_check_branch
    %1126 = sbr.rel (0) target = $region61
  $region60: #{tpu_custom_call.1} parent=0 // pred_region
    _
  $region61: #{tpu_custom_call.1} parent=0 // pred_fallthru
    _

</llo_original>
